<compile_context>
chip_gen: v5e
topology: v5e:2x2
jax: 0.10.0
libtpu: 0.0.40
codegen_flags: <defaults>
</compile_context>

<pallas_src>
import math

import jax
import jax.numpy as jnp
from jax import lax
from jax.experimental import pallas as pl
from jax.experimental.pallas import tpu as pltpu

IN_DIM = 96
MAIN_HID = 96
OUT_DIM = 5
NHEAD = 4
HEAD_DIM = MAIN_HID // NHEAD      # 24 = true head dim (softmax scale uses this)
HEAD_PAD = 32                     # head dim zero-padded 24 -> 32
ATTN_PAD = NHEAD * HEAD_PAD       # 128 lanes for all heads of q / k / v
FF_DIM = 512
LN_EPS = 1e-5


def _layernorm(x, w, b):
    mu = jnp.mean(x, axis=-1, keepdims=True)
    var = jnp.mean((x - mu) ** 2, axis=-1, keepdims=True)
    return (x - mu) * lax.rsqrt(var + LN_EPS) * w + b


def postprocess_kernel(emb_ref, c1w_t_ref, c1b_ref, wqkv_t_ref, bqkv_ref,
                       wo_t_ref, bo_ref, ln1w_ref, ln1b_ref,
                       f1w_t_ref, f1b_ref, f2w_t_ref, f2b_ref,
                       ln2w_ref, ln2b_ref, ow_ref, ob_ref, y_ref):
    bt, L, C = emb_ref.shape
    rows = bt * L
    wdt = c1w_t_ref.dtype          # matmul operand dtype (f32 default, bf16 opt.)

    # SimpleConv1 (Conv1d, kernel_size=1) on flattened rows: h = x @ Wc^T + bc.
    x = emb_ref[...].reshape(rows, C)
    h = jnp.dot(x.astype(wdt), c1w_t_ref[...],
                preferred_element_type=jnp.float32) + c1b_ref[...]

    # ---- SelfAttn1: nn.TransformerEncoderLayer (post-LN, relu, eval) ----
    # Fused QKV: one (rows,96)@(96,384) dot; heads zero-padded 24->32 so the
    # q / k / v slices start on 128-lane boundaries (free extraction).
    qkv = jnp.dot(h.astype(wdt), wqkv_t_ref[...],
                  preferred_element_type=jnp.float32) + bqkv_ref[...]
    q = qkv[:, 0 * ATTN_PAD:1 * ATTN_PAD].reshape(bt, L, ATTN_PAD)
    k = qkv[:, 1 * ATTN_PAD:2 * ATTN_PAD].reshape(bt, L, ATTN_PAD)
    v = qkv[:, 2 * ATTN_PAD:3 * ATTN_PAD].reshape(bt, L, ATTN_PAD)

    scale = 1.0 / (HEAD_DIM ** 0.5)          # true head dim; zero pads add 0
    head_outs = []
    for hh in range(NHEAD):                  # static 4-way unroll
        sl = slice(hh * HEAD_PAD, (hh + 1) * HEAD_PAD)
        qh, kh, vh = q[:, :, sl], k[:, :, sl], v[:, :, sl]
        s = jnp.einsum('bld,bmd->blm', qh, kh,
                       preferred_element_type=jnp.float32) * scale
        s = s - jnp.max(s, axis=-1, keepdims=True)
        p = jnp.exp(s)
        p = p * pl.reciprocal(jnp.sum(p, axis=-1, keepdims=True), approx=True)
        head_outs.append(jnp.einsum('blm,bmd->bld', p, vh,
                                    preferred_element_type=jnp.float32))
    # Heads re-assembled into one (rows, 128) slab -> a single K=128 Wo dot
    # (replaces four poorly-filled K=24 matmuls); pad rows of Wo^T are zero.
    attn = jnp.concatenate(head_outs, axis=-1).reshape(rows, ATTN_PAD)
    attn = jnp.dot(attn.astype(wdt), wo_t_ref[...],
                   preferred_element_type=jnp.float32) + bo_ref[...]

    z = _layernorm(h + attn, ln1w_ref[...], ln1b_ref[...])

    # feed-forward: linear2(relu(linear1(z)))
    f = jnp.dot(z.astype(wdt), f1w_t_ref[...],
                preferred_element_type=jnp.float32) + f1b_ref[...]
    f = jnp.maximum(f, 0.0)
    f = jnp.dot(f.astype(wdt), f2w_t_ref[...],
                preferred_element_type=jnp.float32) + f2b_ref[...]
    z2 = _layernorm(z + f, ln2w_ref[...], ln2b_ref[...])

    # OutProjection (Conv1d k=1) as an NT dot_general -> (OUT_DIM, rows):
    # MXU-native transposed matmul, lane-dense store (lane dim = bt*L, not 5),
    # and the (B, OUT_DIM, L) output layout falls out with no big transpose.
    y = lax.dot_general(ow_ref[...], z2.astype(wdt), (((1,), (1,)), ((), ())),
                        preferred_element_type=jnp.float32) + ob_ref[...]
    y_ref[...] = y.astype(y_ref.dtype)


def _pad_head_cols(wt):
    """(D_in, 96) W^T with heads along columns -> (D_in, 128), 24->32 per head."""
    pieces = []
    for h in range(NHEAD):
        pieces.append(wt[:, h * HEAD_DIM:(h + 1) * HEAD_DIM])
        pieces.append(jnp.zeros((wt.shape[0], HEAD_PAD - HEAD_DIM), wt.dtype))
    return jnp.concatenate(pieces, axis=1)


def _pad_head_vec(b):
    """(96,) bias -> (128,), zero in the per-head pad positions."""
    pieces = []
    for h in range(NHEAD):
        pieces.append(b[h * HEAD_DIM:(h + 1) * HEAD_DIM])
        pieces.append(jnp.zeros((HEAD_PAD - HEAD_DIM,), b.dtype))
    return jnp.concatenate(pieces)


def _pad_head_rows(w):
    """(96, N) Wo^T with heads along rows -> (128, N), zero pad rows."""
    pieces = []
    for h in range(NHEAD):
        pieces.append(w[h * HEAD_DIM:(h + 1) * HEAD_DIM, :])
        pieces.append(jnp.zeros((HEAD_PAD - HEAD_DIM, w.shape[1]), w.dtype))
    return jnp.concatenate(pieces, axis=0)


def _plan_tiles(B, L, max_rows=2048, min_grid_steps=2):
    """Pick (batch_tile, grid_steps, padded_B).

    - rows per step (bt*L) targets ~max_rows: big enough to amortize per-step
      overhead / fill the MXU M dim, small enough for v7x's 64 MiB VMEM
      (the FF intermediate is rows*512 f32 ~= rows*2 KiB).
    - when the grid has >1 step, bt*L must be a multiple of 128 so the
      lane-tiled (OUT_DIM, B_pad*L) output block is 128-lane aligned.
    - when B is large enough we force >= min_grid_steps parallel steps so both
      v7x TensorCores get work; B is zero-padded instead of requiring bt | B.
    """
    cdiv = lambda a, b: -(-a // b)
    step = 128 // math.gcd(L, 128)       # smallest bt with (bt*L) % 128 == 0
    if B * L <= max_rows and B < min_grid_steps * step:
        return B, 1, B                   # tiny problem: single step, no padding
    bt_cap = max(step, (max_rows // max(L, 1)) // step * step)
    bt = min(bt_cap, max(step, cdiv(cdiv(B, min_grid_steps), step) * step))
    grid = cdiv(B, bt)
    return bt, grid, grid * bt


def postprocess_net_simple(emb, bpp, params, *, matmul_dtype=jnp.float32):
    """Forward of PostProcessNetSimple (eval mode).

    The bpp / ffl0 branch of the PyTorch forward is dead code (its result is
    discarded before the output is computed), so it is removed entirely.
    Set matmul_dtype=jnp.bfloat16 for ~3x MXU throughput on v6e/v7x if the
    accuracy budget allows (weights + matmul operands bf16, f32 accumulation).
    """
    del bpp
    B, C, L = emb.shape
    assert C == IN_DIM

    # NCL -> NLC once in XLA so the kernel never transposes activations.
    # TODO(synk): fold this transpose into the kernel's first matmul (trans_a
    # dot_general on a (bt, C, L) block) once the Mosaic lowering is verified
    # not to insert an in-kernel transpose (saves one HBM round-trip; v5e win).
    emb_lc = jnp.transpose(emb, (0, 2, 1)).astype(jnp.float32)

    bt, grid_b, b_pad = _plan_tiles(B, L)
    if b_pad != B:
        emb_lc = jnp.pad(emb_lc, ((0, b_pad - B), (0, 0), (0, 0)))

    wdt = matmul_dtype
    wqkv_t = jnp.concatenate(
        [_pad_head_cols(params["wq"].T), _pad_head_cols(params["wk"].T),
         _pad_head_cols(params["wv"].T)], axis=1).astype(wdt)        # (96, 384)
    bqkv = jnp.concatenate(
        [_pad_head_vec(params["bq"]), _pad_head_vec(params["bk"]),
         _pad_head_vec(params["bv"])]).reshape(1, 3 * ATTN_PAD)      # (1, 384)

    weights = [
        params["c1w"].T.astype(wdt), params["c1b"].reshape(1, MAIN_HID),
        wqkv_t, bqkv,
        _pad_head_rows(params["wo"].T).astype(wdt),                  # (128, 96)
        params["bo"].reshape(1, MAIN_HID),
        params["ln1w"].reshape(1, MAIN_HID), params["ln1b"].reshape(1, MAIN_HID),
        params["f1w"].T.astype(wdt), params["f1b"].reshape(1, FF_DIM),
        params["f2w"].T.astype(wdt), params["f2b"].reshape(1, MAIN_HID),
        params["ln2w"].reshape(1, MAIN_HID), params["ln2b"].reshape(1, MAIN_HID),
        params["ow"].astype(wdt), params["ob"].reshape(OUT_DIM, 1),
    ]

    def const_spec(arr):
        # Constant 2-D operands: full-array block pinned at the origin (never
        # re-fetched after step 0 since the block index never moves).
        return pl.BlockSpec(arr.shape, lambda b: (0, 0))

    in_specs = [pl.BlockSpec((bt, L, C), lambda b: (b, 0, 0))] + \
               [const_spec(a) for a in weights]
    # Lane-dense output: each grid step writes a (OUT_DIM, bt*L) slab.
    out_spec = pl.BlockSpec((OUT_DIM, bt * L), lambda b: (0, b))

    y_flat = pl.pallas_call(
        postprocess_kernel,
        out_shape=jax.ShapeDtypeStruct((OUT_DIM, b_pad * L), jnp.float32),
        grid_spec=pltpu.PrefetchScalarGridSpec(
            num_scalar_prefetch=0, grid=(grid_b,),
            in_specs=in_specs, out_specs=out_spec),
        compiler_params=pltpu.CompilerParams(
            dimension_semantics=("parallel",),
            vmem_limit_bytes=48 * 1024 * 1024),
    )(emb_lc, *weights)

    # (OUT_DIM, B_pad*L) -> (B, OUT_DIM, L); only a tiny output-sized shuffle.
    y = y_flat.reshape(OUT_DIM, b_pad, L)[:, :B, :]
    return jnp.transpose(y, (1, 0, 2))


def init_params(key):
    ks = jax.random.split(key, 10)

    def lin(k, out_f, in_f):
        k1, k2 = jax.random.split(k)
        bound = 1.0 / (in_f ** 0.5)
        wm = jax.random.uniform(k1, (out_f, in_f), jnp.float32, -bound, bound)
        bv = jax.random.uniform(k2, (out_f,), jnp.float32, -bound, bound)
        return wm, bv

    p = {}
    # ffl0 only feeds the dead bpp branch; kept for parameter fidelity, unused.
    t = jnp.array([[[[3., 7., 3.], [12., 40., 12.], [3., 7., 3.]]]], jnp.float32)
    p["ffl0_w"] = jnp.tile(t, (2, 1, 1, 1))
    p["ffl0_b"] = jax.random.uniform(ks[0], (2,), jnp.float32, -1.0 / 3, 1.0 / 3)

    p["c1w"], p["c1b"] = lin(ks[1], MAIN_HID, IN_DIM)
    p["wq"], p["bq"] = lin(ks[2], MAIN_HID, MAIN_HID)
    p["wk"], p["bk"] = lin(ks[3], MAIN_HID, MAIN_HID)
    p["wv"], p["bv"] = lin(ks[4], MAIN_HID, MAIN_HID)
    p["wo"], p["bo"] = lin(ks[5], MAIN_HID, MAIN_HID)
    p["ln1w"] = jnp.ones((MAIN_HID,), jnp.float32)
    p["ln1b"] = jnp.zeros((MAIN_HID,), jnp.float32)
    p["ln2w"] = jnp.ones((MAIN_HID,), jnp.float32)
    p["ln2b"] = jnp.zeros((MAIN_HID,), jnp.float32)
    p["f1w"], p["f1b"] = lin(ks[6], FF_DIM, MAIN_HID)
    p["f2w"], p["f2b"] = lin(ks[7], MAIN_HID, FF_DIM)
    p["ow"], p["ob"] = lin(ks[8], OUT_DIM, MAIN_HID)
    return p


def ref_forward(emb, p):
    """Pure-JAX reference mirroring the PyTorch forward (eval mode)."""
    B, C, L = emb.shape
    D, nh, hd = MAIN_HID, NHEAD, HEAD_DIM
    x = jnp.einsum("oc,bcl->bol", p["c1w"], emb) + p["c1b"].reshape(1, D, 1)
    h = jnp.transpose(x, (0, 2, 1))                          # (B, L, D)
    q = h @ p["wq"].T + p["bq"]
    k = h @ p["wk"].T + p["bk"]
    v = h @ p["wv"].T + p["bv"]
    qh = q.reshape(B, L, nh, hd).transpose(0, 2, 1, 3)
    kh = k.reshape(B, L, nh, hd).transpose(0, 2, 1, 3)
    vh = v.reshape(B, L, nh, hd).transpose(0, 2, 1, 3)
    s = jnp.einsum("bhqd,bhkd->bhqk", qh, kh) / (hd ** 0.5)
    a = jax.nn.softmax(s, axis=-1)
    o = jnp.einsum("bhqk,bhkd->bhqd", a, vh).transpose(0, 2, 1, 3).reshape(B, L, D)
    o = o @ p["wo"].T + p["bo"]

    def ln(x_, w_, b_):
        mu = x_.mean(-1, keepdims=True)
        var = ((x_ - mu) ** 2).mean(-1, keepdims=True)
        return (x_ - mu) / jnp.sqrt(var + LN_EPS) * w_ + b_

    z = ln(h + o, p["ln1w"], p["ln1b"])
    f = jax.nn.relu(z @ p["f1w"].T + p["f1b"]) @ p["f2w"].T + p["f2b"]
    z2 = ln(z + f, p["ln2w"], p["ln2b"])
    y = jnp.einsum("od,bld->bol", p["ow"], z2) + p["ob"].reshape(1, OUT_DIM, 1)
    return y


if __name__ == "__main__":
    key = jax.random.PRNGKey(0)
    ke, kb = jax.random.split(key)
    params = init_params(jax.random.PRNGKey(42))

    B, L = 2, 16
    emb = jax.random.normal(ke, (B, IN_DIM, L), jnp.float32)
    bpp = jax.random.uniform(kb, (B, L, L), jnp.float32)

    fwd = jax.jit(postprocess_net_simple)
    y = jax.block_until_ready(fwd(emb, bpp, params))

    y_ref = ref_forward(emb, params)
    assert y.shape == (B, OUT_DIM, L)
    err = float(jnp.max(jnp.abs(y - y_ref)))
    assert jnp.allclose(y, y_ref, atol=2e-3, rtol=2e-3), f"max abs err {err}"
    print("KERNEL_OK")
</pallas_src>

<mosaic_0001>
module attributes {stable_mosaic.version = 11 : i64} {
  func.func @postprocess_kernel(%arg0: i32, %arg1: memref<2x16x96xf32, #tpu.memory_space<vmem>>, %arg2: memref<96x96xf32, #tpu.memory_space<vmem>>, %arg3: memref<1x96xf32, #tpu.memory_space<vmem>>, %arg4: memref<96x384xf32, #tpu.memory_space<vmem>>, %arg5: memref<1x384xf32, #tpu.memory_space<vmem>>, %arg6: memref<128x96xf32, #tpu.memory_space<vmem>>, %arg7: memref<1x96xf32, #tpu.memory_space<vmem>>, %arg8: memref<1x96xf32, #tpu.memory_space<vmem>>, %arg9: memref<1x96xf32, #tpu.memory_space<vmem>>, %arg10: memref<96x512xf32, #tpu.memory_space<vmem>>, %arg11: memref<1x512xf32, #tpu.memory_space<vmem>>, %arg12: memref<512x96xf32, #tpu.memory_space<vmem>>, %arg13: memref<1x96xf32, #tpu.memory_space<vmem>>, %arg14: memref<1x96xf32, #tpu.memory_space<vmem>>, %arg15: memref<1x96xf32, #tpu.memory_space<vmem>>, %arg16: memref<5x96xf32, #tpu.memory_space<vmem>>, %arg17: memref<5x1xf32, #tpu.memory_space<vmem>>, %arg18: memref<5x32xf32, #tpu.memory_space<vmem>>) attributes {dimension_semantics = [#tpu.dimension_semantics<parallel>], iteration_bounds = array<i64: 1>, scalar_prefetch = 0 : i64, scratch_operands = 0 : i64, tpu.core_type = #tpu.core_type<tc>, window_params = [{transform_indices = @transform_0, window_bounds = array<i64: 2, 16, 96>}, {pipeline_mode = #tpu.pipeline_mode<synchronous>, transform_indices = @transform_1, window_bounds = array<i64: 96, 96>}, {pipeline_mode = #tpu.pipeline_mode<synchronous>, transform_indices = @transform_2, window_bounds = array<i64: 1, 96>}, {pipeline_mode = #tpu.pipeline_mode<synchronous>, transform_indices = @transform_3, window_bounds = array<i64: 96, 384>}, {pipeline_mode = #tpu.pipeline_mode<synchronous>, transform_indices = @transform_4, window_bounds = array<i64: 1, 384>}, {pipeline_mode = #tpu.pipeline_mode<synchronous>, transform_indices = @transform_5, window_bounds = array<i64: 128, 96>}, {pipeline_mode = #tpu.pipeline_mode<synchronous>, transform_indices = @transform_6, window_bounds = array<i64: 1, 96>}, {pipeline_mode = #tpu.pipeline_mode<synchronous>, transform_indices = @transform_7, window_bounds = array<i64: 1, 96>}, {pipeline_mode = #tpu.pipeline_mode<synchronous>, transform_indices = @transform_8, window_bounds = array<i64: 1, 96>}, {pipeline_mode = #tpu.pipeline_mode<synchronous>, transform_indices = @transform_9, window_bounds = array<i64: 96, 512>}, {pipeline_mode = #tpu.pipeline_mode<synchronous>, transform_indices = @transform_10, window_bounds = array<i64: 1, 512>}, {pipeline_mode = #tpu.pipeline_mode<synchronous>, transform_indices = @transform_11, window_bounds = array<i64: 512, 96>}, {pipeline_mode = #tpu.pipeline_mode<synchronous>, transform_indices = @transform_12, window_bounds = array<i64: 1, 96>}, {pipeline_mode = #tpu.pipeline_mode<synchronous>, transform_indices = @transform_13, window_bounds = array<i64: 1, 96>}, {pipeline_mode = #tpu.pipeline_mode<synchronous>, transform_indices = @transform_14, window_bounds = array<i64: 1, 96>}, {pipeline_mode = #tpu.pipeline_mode<synchronous>, transform_indices = @transform_15, window_bounds = array<i64: 5, 96>}, {pipeline_mode = #tpu.pipeline_mode<synchronous>, transform_indices = @transform_16, window_bounds = array<i64: 5, 1>}, {transform_indices = @transform_17, window_bounds = array<i64: 5, 32>}]} {
    %c0 = arith.constant 0 : index
    %c0_0 = arith.constant 0 : index
    %c0_1 = arith.constant 0 : index
    %0 = vector.load %arg1[%c0, %c0_0, %c0_1] : memref<2x16x96xf32, #tpu.memory_space<vmem>>, vector<2x16x96xf32>
    %1 = vector.shape_cast %0 : vector<2x16x96xf32> to vector<32x96xf32>
    %c0_2 = arith.constant 0 : index
    %c0_3 = arith.constant 0 : index
    %2 = vector.load %arg2[%c0_2, %c0_3] : memref<96x96xf32, #tpu.memory_space<vmem>>, vector<96x96xf32>
    %cst = arith.constant dense<0.000000e+00> : vector<32x96xf32>
    %3 = tpu.matmul %1, %2, %cst {dimension_numbers = #tpu.dot_dimension_numbers<[1], [0], [0], [1], [0, 0, 1, 1], [], []>} : vector<32x96xf32>, vector<96x96xf32>, vector<32x96xf32> -> vector<32x96xf32>
    %c0_4 = arith.constant 0 : index
    %c0_5 = arith.constant 0 : index
    %4 = vector.load %arg3[%c0_4, %c0_5] : memref<1x96xf32, #tpu.memory_space<vmem>>, vector<1x96xf32>
    %5 = vector.broadcast %4 : vector<1x96xf32> to vector<32x96xf32>
    %6 = arith.addf %3, %5 : vector<32x96xf32>
    %c0_6 = arith.constant 0 : index
    %c0_7 = arith.constant 0 : index
    %7 = vector.load %arg4[%c0_6, %c0_7] : memref<96x384xf32, #tpu.memory_space<vmem>>, vector<96x384xf32>
    %cst_8 = arith.constant dense<0.000000e+00> : vector<32x384xf32>
    %8 = tpu.matmul %6, %7, %cst_8 {dimension_numbers = #tpu.dot_dimension_numbers<[1], [0], [0], [1], [0, 0, 1, 1], [], []>} : vector<32x96xf32>, vector<96x384xf32>, vector<32x384xf32> -> vector<32x384xf32>
    %c0_9 = arith.constant 0 : index
    %c0_10 = arith.constant 0 : index
    %9 = vector.load %arg5[%c0_9, %c0_10] : memref<1x384xf32, #tpu.memory_space<vmem>>, vector<1x384xf32>
    %10 = vector.broadcast %9 : vector<1x384xf32> to vector<32x384xf32>
    %11 = arith.addf %8, %10 : vector<32x384xf32>
    %12 = vector.extract_strided_slice %11 {offsets = [0, 0], sizes = [32, 128], strides = [1, 1]} : vector<32x384xf32> to vector<32x128xf32>
    %13 = vector.shape_cast %12 : vector<32x128xf32> to vector<2x16x128xf32>
    %14 = vector.extract_strided_slice %11 {offsets = [0, 128], sizes = [32, 128], strides = [1, 1]} : vector<32x384xf32> to vector<32x128xf32>
    %15 = vector.shape_cast %14 : vector<32x128xf32> to vector<2x16x128xf32>
    %16 = vector.extract_strided_slice %11 {offsets = [0, 256], sizes = [32, 128], strides = [1, 1]} : vector<32x384xf32> to vector<32x128xf32>
    %17 = vector.shape_cast %16 : vector<32x128xf32> to vector<2x16x128xf32>
    %18 = vector.extract_strided_slice %13 {offsets = [0, 0, 0], sizes = [2, 16, 32], strides = [1, 1, 1]} : vector<2x16x128xf32> to vector<2x16x32xf32>
    %19 = vector.extract_strided_slice %15 {offsets = [0, 0, 0], sizes = [2, 16, 32], strides = [1, 1, 1]} : vector<2x16x128xf32> to vector<2x16x32xf32>
    %20 = vector.extract_strided_slice %17 {offsets = [0, 0, 0], sizes = [2, 16, 32], strides = [1, 1, 1]} : vector<2x16x128xf32> to vector<2x16x32xf32>
    "tpu.trace_start"() <{level = 10 : i32, message = "bld,bmd->blm"}> : () -> ()
    %cst_11 = arith.constant dense<0.000000e+00> : vector<2x16x16xf32>
    %21 = tpu.matmul %18, %19, %cst_11 {dimension_numbers = #tpu.dot_dimension_numbers<[2], [2], [1], [1], [0, 0, 0, 1, 1, 1], [0], [0]>} : vector<2x16x32xf32>, vector<2x16x32xf32>, vector<2x16x16xf32> -> vector<2x16x16xf32>
    "tpu.trace_stop"() : () -> ()
    %cst_12 = arith.constant 0.204124153 : f32
    %22 = vector.broadcast %cst_12 : f32 to vector<2x16x16xf32>
    %23 = arith.mulf %21, %22 : vector<2x16x16xf32>
    %cst_13 = arith.constant dense<0xFF800000> : vector<2x16xf32>
    %24 = vector.multi_reduction <maximumf>, %23, %cst_13 [2] : vector<2x16x16xf32> to vector<2x16xf32>
    %25 = vector.shape_cast %24 : vector<2x16xf32> to vector<2x16x1xf32>
    %26 = vector.broadcast %25 : vector<2x16x1xf32> to vector<2x16x16xf32>
    %27 = arith.subf %23, %26 : vector<2x16x16xf32>
    %28 = math.exp %27 : vector<2x16x16xf32>
    %cst_14 = arith.constant dense<0.000000e+00> : vector<2x16xf32>
    %29 = vector.multi_reduction <add>, %28, %cst_14 [2] : vector<2x16x16xf32> to vector<2x16xf32>
    %30 = vector.shape_cast %29 : vector<2x16xf32> to vector<2x16x1xf32>
    %31 = tpu.reciprocal %30 {approx = true} : vector<2x16x1xf32> -> vector<2x16x1xf32>
    %32 = vector.broadcast %31 : vector<2x16x1xf32> to vector<2x16x16xf32>
    %33 = arith.mulf %28, %32 : vector<2x16x16xf32>
    "tpu.trace_start"() <{level = 10 : i32, message = "blm,bmd->bld"}> : () -> ()
    %cst_15 = arith.constant dense<0.000000e+00> : vector<2x16x32xf32>
    %34 = tpu.matmul %33, %20, %cst_15 {dimension_numbers = #tpu.dot_dimension_numbers<[2], [1], [1], [2], [0, 0, 0, 1, 1, 2], [0], [0]>} : vector<2x16x16xf32>, vector<2x16x32xf32>, vector<2x16x32xf32> -> vector<2x16x32xf32>
    "tpu.trace_stop"() : () -> ()
    %35 = vector.extract_strided_slice %13 {offsets = [0, 0, 32], sizes = [2, 16, 32], strides = [1, 1, 1]} : vector<2x16x128xf32> to vector<2x16x32xf32>
    %36 = vector.extract_strided_slice %15 {offsets = [0, 0, 32], sizes = [2, 16, 32], strides = [1, 1, 1]} : vector<2x16x128xf32> to vector<2x16x32xf32>
    %37 = vector.extract_strided_slice %17 {offsets = [0, 0, 32], sizes = [2, 16, 32], strides = [1, 1, 1]} : vector<2x16x128xf32> to vector<2x16x32xf32>
    "tpu.trace_start"() <{level = 10 : i32, message = "bld,bmd->blm"}> : () -> ()
    %cst_16 = arith.constant dense<0.000000e+00> : vector<2x16x16xf32>
    %38 = tpu.matmul %35, %36, %cst_16 {dimension_numbers = #tpu.dot_dimension_numbers<[2], [2], [1], [1], [0, 0, 0, 1, 1, 1], [0], [0]>} : vector<2x16x32xf32>, vector<2x16x32xf32>, vector<2x16x16xf32> -> vector<2x16x16xf32>
    "tpu.trace_stop"() : () -> ()
    %cst_17 = arith.constant 0.204124153 : f32
    %39 = vector.broadcast %cst_17 : f32 to vector<2x16x16xf32>
    %40 = arith.mulf %38, %39 : vector<2x16x16xf32>
    %cst_18 = arith.constant dense<0xFF800000> : vector<2x16xf32>
    %41 = vector.multi_reduction <maximumf>, %40, %cst_18 [2] : vector<2x16x16xf32> to vector<2x16xf32>
    %42 = vector.shape_cast %41 : vector<2x16xf32> to vector<2x16x1xf32>
    %43 = vector.broadcast %42 : vector<2x16x1xf32> to vector<2x16x16xf32>
    %44 = arith.subf %40, %43 : vector<2x16x16xf32>
    %45 = math.exp %44 : vector<2x16x16xf32>
    %cst_19 = arith.constant dense<0.000000e+00> : vector<2x16xf32>
    %46 = vector.multi_reduction <add>, %45, %cst_19 [2] : vector<2x16x16xf32> to vector<2x16xf32>
    %47 = vector.shape_cast %46 : vector<2x16xf32> to vector<2x16x1xf32>
    %48 = tpu.reciprocal %47 {approx = true} : vector<2x16x1xf32> -> vector<2x16x1xf32>
    %49 = vector.broadcast %48 : vector<2x16x1xf32> to vector<2x16x16xf32>
    %50 = arith.mulf %45, %49 : vector<2x16x16xf32>
    "tpu.trace_start"() <{level = 10 : i32, message = "blm,bmd->bld"}> : () -> ()
    %cst_20 = arith.constant dense<0.000000e+00> : vector<2x16x32xf32>
    %51 = tpu.matmul %50, %37, %cst_20 {dimension_numbers = #tpu.dot_dimension_numbers<[2], [1], [1], [2], [0, 0, 0, 1, 1, 2], [0], [0]>} : vector<2x16x16xf32>, vector<2x16x32xf32>, vector<2x16x32xf32> -> vector<2x16x32xf32>
    "tpu.trace_stop"() : () -> ()
    %52 = vector.extract_strided_slice %13 {offsets = [0, 0, 64], sizes = [2, 16, 32], strides = [1, 1, 1]} : vector<2x16x128xf32> to vector<2x16x32xf32>
    %53 = vector.extract_strided_slice %15 {offsets = [0, 0, 64], sizes = [2, 16, 32], strides = [1, 1, 1]} : vector<2x16x128xf32> to vector<2x16x32xf32>
    %54 = vector.extract_strided_slice %17 {offsets = [0, 0, 64], sizes = [2, 16, 32], strides = [1, 1, 1]} : vector<2x16x128xf32> to vector<2x16x32xf32>
    "tpu.trace_start"() <{level = 10 : i32, message = "bld,bmd->blm"}> : () -> ()
    %cst_21 = arith.constant dense<0.000000e+00> : vector<2x16x16xf32>
    %55 = tpu.matmul %52, %53, %cst_21 {dimension_numbers = #tpu.dot_dimension_numbers<[2], [2], [1], [1], [0, 0, 0, 1, 1, 1], [0], [0]>} : vector<2x16x32xf32>, vector<2x16x32xf32>, vector<2x16x16xf32> -> vector<2x16x16xf32>
    "tpu.trace_stop"() : () -> ()
    %cst_22 = arith.constant 0.204124153 : f32
    %56 = vector.broadcast %cst_22 : f32 to vector<2x16x16xf32>
    %57 = arith.mulf %55, %56 : vector<2x16x16xf32>
    %cst_23 = arith.constant dense<0xFF800000> : vector<2x16xf32>
    %58 = vector.multi_reduction <maximumf>, %57, %cst_23 [2] : vector<2x16x16xf32> to vector<2x16xf32>
    %59 = vector.shape_cast %58 : vector<2x16xf32> to vector<2x16x1xf32>
    %60 = vector.broadcast %59 : vector<2x16x1xf32> to vector<2x16x16xf32>
    %61 = arith.subf %57, %60 : vector<2x16x16xf32>
    %62 = math.exp %61 : vector<2x16x16xf32>
    %cst_24 = arith.constant dense<0.000000e+00> : vector<2x16xf32>
    %63 = vector.multi_reduction <add>, %62, %cst_24 [2] : vector<2x16x16xf32> to vector<2x16xf32>
    %64 = vector.shape_cast %63 : vector<2x16xf32> to vector<2x16x1xf32>
    %65 = tpu.reciprocal %64 {approx = true} : vector<2x16x1xf32> -> vector<2x16x1xf32>
    %66 = vector.broadcast %65 : vector<2x16x1xf32> to vector<2x16x16xf32>
    %67 = arith.mulf %62, %66 : vector<2x16x16xf32>
    "tpu.trace_start"() <{level = 10 : i32, message = "blm,bmd->bld"}> : () -> ()
    %cst_25 = arith.constant dense<0.000000e+00> : vector<2x16x32xf32>
    %68 = tpu.matmul %67, %54, %cst_25 {dimension_numbers = #tpu.dot_dimension_numbers<[2], [1], [1], [2], [0, 0, 0, 1, 1, 2], [0], [0]>} : vector<2x16x16xf32>, vector<2x16x32xf32>, vector<2x16x32xf32> -> vector<2x16x32xf32>
    "tpu.trace_stop"() : () -> ()
    %69 = vector.extract_strided_slice %13 {offsets = [0, 0, 96], sizes = [2, 16, 32], strides = [1, 1, 1]} : vector<2x16x128xf32> to vector<2x16x32xf32>
    %70 = vector.extract_strided_slice %15 {offsets = [0, 0, 96], sizes = [2, 16, 32], strides = [1, 1, 1]} : vector<2x16x128xf32> to vector<2x16x32xf32>
    %71 = vector.extract_strided_slice %17 {offsets = [0, 0, 96], sizes = [2, 16, 32], strides = [1, 1, 1]} : vector<2x16x128xf32> to vector<2x16x32xf32>
    "tpu.trace_start"() <{level = 10 : i32, message = "bld,bmd->blm"}> : () -> ()
    %cst_26 = arith.constant dense<0.000000e+00> : vector<2x16x16xf32>
    %72 = tpu.matmul %69, %70, %cst_26 {dimension_numbers = #tpu.dot_dimension_numbers<[2], [2], [1], [1], [0, 0, 0, 1, 1, 1], [0], [0]>} : vector<2x16x32xf32>, vector<2x16x32xf32>, vector<2x16x16xf32> -> vector<2x16x16xf32>
    "tpu.trace_stop"() : () -> ()
    %cst_27 = arith.constant 0.204124153 : f32
    %73 = vector.broadcast %cst_27 : f32 to vector<2x16x16xf32>
    %74 = arith.mulf %72, %73 : vector<2x16x16xf32>
    %cst_28 = arith.constant dense<0xFF800000> : vector<2x16xf32>
    %75 = vector.multi_reduction <maximumf>, %74, %cst_28 [2] : vector<2x16x16xf32> to vector<2x16xf32>
    %76 = vector.shape_cast %75 : vector<2x16xf32> to vector<2x16x1xf32>
    %77 = vector.broadcast %76 : vector<2x16x1xf32> to vector<2x16x16xf32>
    %78 = arith.subf %74, %77 : vector<2x16x16xf32>
    %79 = math.exp %78 : vector<2x16x16xf32>
    %cst_29 = arith.constant dense<0.000000e+00> : vector<2x16xf32>
    %80 = vector.multi_reduction <add>, %79, %cst_29 [2] : vector<2x16x16xf32> to vector<2x16xf32>
    %81 = vector.shape_cast %80 : vector<2x16xf32> to vector<2x16x1xf32>
    %82 = tpu.reciprocal %81 {approx = true} : vector<2x16x1xf32> -> vector<2x16x1xf32>
    %83 = vector.broadcast %82 : vector<2x16x1xf32> to vector<2x16x16xf32>
    %84 = arith.mulf %79, %83 : vector<2x16x16xf32>
    "tpu.trace_start"() <{level = 10 : i32, message = "blm,bmd->bld"}> : () -> ()
    %cst_30 = arith.constant dense<0.000000e+00> : vector<2x16x32xf32>
    %85 = tpu.matmul %84, %71, %cst_30 {dimension_numbers = #tpu.dot_dimension_numbers<[2], [1], [1], [2], [0, 0, 0, 1, 1, 2], [0], [0]>} : vector<2x16x16xf32>, vector<2x16x32xf32>, vector<2x16x32xf32> -> vector<2x16x32xf32>
    "tpu.trace_stop"() : () -> ()
    %86 = tpu.concatenate %34, %51, %68, %85 in 2 : vector<2x16x32xf32>, vector<2x16x32xf32>, vector<2x16x32xf32>, vector<2x16x32xf32> -> vector<2x16x128xf32>
    %87 = vector.shape_cast %86 : vector<2x16x128xf32> to vector<32x128xf32>
    %c0_31 = arith.constant 0 : index
    %c0_32 = arith.constant 0 : index
    %88 = vector.load %arg6[%c0_31, %c0_32] : memref<128x96xf32, #tpu.memory_space<vmem>>, vector<128x96xf32>
    %cst_33 = arith.constant dense<0.000000e+00> : vector<32x96xf32>
    %89 = tpu.matmul %87, %88, %cst_33 {dimension_numbers = #tpu.dot_dimension_numbers<[1], [0], [0], [1], [0, 0, 1, 1], [], []>} : vector<32x128xf32>, vector<128x96xf32>, vector<32x96xf32> -> vector<32x96xf32>
    %c0_34 = arith.constant 0 : index
    %c0_35 = arith.constant 0 : index
    %90 = vector.load %arg7[%c0_34, %c0_35] : memref<1x96xf32, #tpu.memory_space<vmem>>, vector<1x96xf32>
    %91 = vector.broadcast %90 : vector<1x96xf32> to vector<32x96xf32>
    %92 = arith.addf %89, %91 : vector<32x96xf32>
    %93 = arith.addf %6, %92 : vector<32x96xf32>
    %c0_36 = arith.constant 0 : index
    %c0_37 = arith.constant 0 : index
    %94 = vector.load %arg8[%c0_36, %c0_37] : memref<1x96xf32, #tpu.memory_space<vmem>>, vector<1x96xf32>
    %c0_38 = arith.constant 0 : index
    %c0_39 = arith.constant 0 : index
    %95 = vector.load %arg9[%c0_38, %c0_39] : memref<1x96xf32, #tpu.memory_space<vmem>>, vector<1x96xf32>
    %cst_40 = arith.constant dense<0.000000e+00> : vector<32xf32>
    %96 = vector.multi_reduction <add>, %93, %cst_40 [1] : vector<32x96xf32> to vector<32xf32>
    %97 = vector.shape_cast %96 : vector<32xf32> to vector<32x1xf32>
    %cst_41 = arith.constant 9.600000e+01 : f32
    %98 = vector.broadcast %cst_41 : f32 to vector<32x1xf32>
    %99 = arith.divf %97, %98 : vector<32x1xf32>
    %100 = vector.broadcast %99 : vector<32x1xf32> to vector<32x96xf32>
    %101 = arith.subf %93, %100 : vector<32x96xf32>
    %102 = arith.mulf %101, %101 : vector<32x96xf32>
    %cst_42 = arith.constant dense<0.000000e+00> : vector<32xf32>
    %103 = vector.multi_reduction <add>, %102, %cst_42 [1] : vector<32x96xf32> to vector<32xf32>
    %104 = vector.shape_cast %103 : vector<32xf32> to vector<32x1xf32>
    %cst_43 = arith.constant 9.600000e+01 : f32
    %105 = vector.broadcast %cst_43 : f32 to vector<32x1xf32>
    %106 = arith.divf %104, %105 : vector<32x1xf32>
    %107 = vector.broadcast %99 : vector<32x1xf32> to vector<32x96xf32>
    %108 = arith.subf %93, %107 : vector<32x96xf32>
    %cst_44 = arith.constant 9.99999974E-6 : f32
    %109 = vector.broadcast %cst_44 : f32 to vector<32x1xf32>
    %110 = arith.addf %106, %109 : vector<32x1xf32>
    %111 = math.rsqrt %110 : vector<32x1xf32>
    %112 = vector.broadcast %111 : vector<32x1xf32> to vector<32x96xf32>
    %113 = arith.mulf %108, %112 : vector<32x96xf32>
    %114 = vector.broadcast %94 : vector<1x96xf32> to vector<32x96xf32>
    %115 = arith.mulf %113, %114 : vector<32x96xf32>
    %116 = vector.broadcast %95 : vector<1x96xf32> to vector<32x96xf32>
    %117 = arith.addf %115, %116 : vector<32x96xf32>
    %c0_45 = arith.constant 0 : index
    %c0_46 = arith.constant 0 : index
    %118 = vector.load %arg10[%c0_45, %c0_46] : memref<96x512xf32, #tpu.memory_space<vmem>>, vector<96x512xf32>
    %cst_47 = arith.constant dense<0.000000e+00> : vector<32x512xf32>
    %119 = tpu.matmul %117, %118, %cst_47 {dimension_numbers = #tpu.dot_dimension_numbers<[1], [0], [0], [1], [0, 0, 1, 1], [], []>} : vector<32x96xf32>, vector<96x512xf32>, vector<32x512xf32> -> vector<32x512xf32>
    %c0_48 = arith.constant 0 : index
    %c0_49 = arith.constant 0 : index
    %120 = vector.load %arg11[%c0_48, %c0_49] : memref<1x512xf32, #tpu.memory_space<vmem>>, vector<1x512xf32>
    %121 = vector.broadcast %120 : vector<1x512xf32> to vector<32x512xf32>
    %122 = arith.addf %119, %121 : vector<32x512xf32>
    %cst_50 = arith.constant 0.000000e+00 : f32
    %123 = vector.broadcast %cst_50 : f32 to vector<32x512xf32>
    %124 = arith.maximumf %122, %123 : vector<32x512xf32>
    %c0_51 = arith.constant 0 : index
    %c0_52 = arith.constant 0 : index
    %125 = vector.load %arg12[%c0_51, %c0_52] : memref<512x96xf32, #tpu.memory_space<vmem>>, vector<512x96xf32>
    %cst_53 = arith.constant dense<0.000000e+00> : vector<32x96xf32>
    %126 = tpu.matmul %124, %125, %cst_53 {dimension_numbers = #tpu.dot_dimension_numbers<[1], [0], [0], [1], [0, 0, 1, 1], [], []>} : vector<32x512xf32>, vector<512x96xf32>, vector<32x96xf32> -> vector<32x96xf32>
    %c0_54 = arith.constant 0 : index
    %c0_55 = arith.constant 0 : index
    %127 = vector.load %arg13[%c0_54, %c0_55] : memref<1x96xf32, #tpu.memory_space<vmem>>, vector<1x96xf32>
    %128 = vector.broadcast %127 : vector<1x96xf32> to vector<32x96xf32>
    %129 = arith.addf %126, %128 : vector<32x96xf32>
    %130 = arith.addf %117, %129 : vector<32x96xf32>
    %c0_56 = arith.constant 0 : index
    %c0_57 = arith.constant 0 : index
    %131 = vector.load %arg14[%c0_56, %c0_57] : memref<1x96xf32, #tpu.memory_space<vmem>>, vector<1x96xf32>
    %c0_58 = arith.constant 0 : index
    %c0_59 = arith.constant 0 : index
    %132 = vector.load %arg15[%c0_58, %c0_59] : memref<1x96xf32, #tpu.memory_space<vmem>>, vector<1x96xf32>
    %cst_60 = arith.constant dense<0.000000e+00> : vector<32xf32>
    %133 = vector.multi_reduction <add>, %130, %cst_60 [1] : vector<32x96xf32> to vector<32xf32>
    %134 = vector.shape_cast %133 : vector<32xf32> to vector<32x1xf32>
    %cst_61 = arith.constant 9.600000e+01 : f32
    %135 = vector.broadcast %cst_61 : f32 to vector<32x1xf32>
    %136 = arith.divf %134, %135 : vector<32x1xf32>
    %137 = vector.broadcast %136 : vector<32x1xf32> to vector<32x96xf32>
    %138 = arith.subf %130, %137 : vector<32x96xf32>
    %139 = arith.mulf %138, %138 : vector<32x96xf32>
    %cst_62 = arith.constant dense<0.000000e+00> : vector<32xf32>
    %140 = vector.multi_reduction <add>, %139, %cst_62 [1] : vector<32x96xf32> to vector<32xf32>
    %141 = vector.shape_cast %140 : vector<32xf32> to vector<32x1xf32>
    %cst_63 = arith.constant 9.600000e+01 : f32
    %142 = vector.broadcast %cst_63 : f32 to vector<32x1xf32>
    %143 = arith.divf %141, %142 : vector<32x1xf32>
    %144 = vector.broadcast %136 : vector<32x1xf32> to vector<32x96xf32>
    %145 = arith.subf %130, %144 : vector<32x96xf32>
    %cst_64 = arith.constant 9.99999974E-6 : f32
    %146 = vector.broadcast %cst_64 : f32 to vector<32x1xf32>
    %147 = arith.addf %143, %146 : vector<32x1xf32>
    %148 = math.rsqrt %147 : vector<32x1xf32>
    %149 = vector.broadcast %148 : vector<32x1xf32> to vector<32x96xf32>
    %150 = arith.mulf %145, %149 : vector<32x96xf32>
    %151 = vector.broadcast %131 : vector<1x96xf32> to vector<32x96xf32>
    %152 = arith.mulf %150, %151 : vector<32x96xf32>
    %153 = vector.broadcast %132 : vector<1x96xf32> to vector<32x96xf32>
    %154 = arith.addf %152, %153 : vector<32x96xf32>
    %c0_65 = arith.constant 0 : index
    %c0_66 = arith.constant 0 : index
    %155 = vector.load %arg16[%c0_65, %c0_66] : memref<5x96xf32, #tpu.memory_space<vmem>>, vector<5x96xf32>
    %cst_67 = arith.constant dense<0.000000e+00> : vector<5x32xf32>
    %156 = tpu.matmul %155, %154, %cst_67 {dimension_numbers = #tpu.dot_dimension_numbers<[1], [1], [0], [0], [0, 0, 1, 0], [], []>} : vector<5x96xf32>, vector<32x96xf32>, vector<5x32xf32> -> vector<5x32xf32>
    %c0_68 = arith.constant 0 : index
    %c0_69 = arith.constant 0 : index
    %157 = vector.load %arg17[%c0_68, %c0_69] : memref<5x1xf32, #tpu.memory_space<vmem>>, vector<5x1xf32>
    %158 = vector.broadcast %157 : vector<5x1xf32> to vector<5x32xf32>
    %159 = arith.addf %156, %158 : vector<5x32xf32>
    %c0_70 = arith.constant 0 : index
    %c0_71 = arith.constant 0 : index
    %160 = vector.load %arg18[%c0_70, %c0_71] : memref<5x32xf32, #tpu.memory_space<vmem>>, vector<5x32xf32>
    tpu.vector_store %arg18[%c0_70, %c0_71], %159 {strides = array<i32>} : memref<5x32xf32, #tpu.memory_space<vmem>>, vector<5x32xf32>,
    return
  }
  func.func @transform_0(%arg0: i32) -> (i32, i32, i32) {
    %c0_i32 = arith.constant 0 : i32
    %c0_i32_0 = arith.constant 0 : i32
    %c0_i32_1 = arith.constant 0 : i32
    return %arg0, %c0_i32, %c0_i32_0 : i32, i32, i32
  }
  func.func @transform_1(%arg0: i32) -> (i32, i32) {
    %c0_i32 = arith.constant 0 : i32
    %c0_i32_0 = arith.constant 0 : i32
    %c0_i32_1 = arith.constant 0 : i32
    return %c0_i32, %c0_i32_0 : i32, i32
  }
  func.func @transform_2(%arg0: i32) -> (i32, i32) {
    %c0_i32 = arith.constant 0 : i32
    %c0_i32_0 = arith.constant 0 : i32
    %c0_i32_1 = arith.constant 0 : i32
    return %c0_i32, %c0_i32_0 : i32, i32
  }
  func.func @transform_3(%arg0: i32) -> (i32, i32) {
    %c0_i32 = arith.constant 0 : i32
    %c0_i32_0 = arith.constant 0 : i32
    %c0_i32_1 = arith.constant 0 : i32
    return %c0_i32, %c0_i32_0 : i32, i32
  }
  func.func @transform_4(%arg0: i32) -> (i32, i32) {
    %c0_i32 = arith.constant 0 : i32
    %c0_i32_0 = arith.constant 0 : i32
    %c0_i32_1 = arith.constant 0 : i32
    return %c0_i32, %c0_i32_0 : i32, i32
  }
  func.func @transform_5(%arg0: i32) -> (i32, i32) {
    %c0_i32 = arith.constant 0 : i32
    %c0_i32_0 = arith.constant 0 : i32
    %c0_i32_1 = arith.constant 0 : i32
    return %c0_i32, %c0_i32_0 : i32, i32
  }
  func.func @transform_6(%arg0: i32) -> (i32, i32) {
    %c0_i32 = arith.constant 0 : i32
    %c0_i32_0 = arith.constant 0 : i32
    %c0_i32_1 = arith.constant 0 : i32
    return %c0_i32, %c0_i32_0 : i32, i32
  }
  func.func @transform_7(%arg0: i32) -> (i32, i32) {
    %c0_i32 = arith.constant 0 : i32
    %c0_i32_0 = arith.constant 0 : i32
    %c0_i32_1 = arith.constant 0 : i32
    return %c0_i32, %c0_i32_0 : i32, i32
  }
  func.func @transform_8(%arg0: i32) -> (i32, i32) {
    %c0_i32 = arith.constant 0 : i32
    %c0_i32_0 = arith.constant 0 : i32
    %c0_i32_1 = arith.constant 0 : i32
    return %c0_i32, %c0_i32_0 : i32, i32
  }
  func.func @transform_9(%arg0: i32) -> (i32, i32) {
    %c0_i32 = arith.constant 0 : i32
    %c0_i32_0 = arith.constant 0 : i32
    %c0_i32_1 = arith.constant 0 : i32
    return %c0_i32, %c0_i32_0 : i32, i32
  }
  func.func @transform_10(%arg0: i32) -> (i32, i32) {
    %c0_i32 = arith.constant 0 : i32
    %c0_i32_0 = arith.constant 0 : i32
    %c0_i32_1 = arith.constant 0 : i32
    return %c0_i32, %c0_i32_0 : i32, i32
  }
  func.func @transform_11(%arg0: i32) -> (i32, i32) {
    %c0_i32 = arith.constant 0 : i32
    %c0_i32_0 = arith.constant 0 : i32
    %c0_i32_1 = arith.constant 0 : i32
    return %c0_i32, %c0_i32_0 : i32, i32
  }
  func.func @transform_12(%arg0: i32) -> (i32, i32) {
    %c0_i32 = arith.constant 0 : i32
    %c0_i32_0 = arith.constant 0 : i32
    %c0_i32_1 = arith.constant 0 : i32
    return %c0_i32, %c0_i32_0 : i32, i32
  }
  func.func @transform_13(%arg0: i32) -> (i32, i32) {
    %c0_i32 = arith.constant 0 : i32
    %c0_i32_0 = arith.constant 0 : i32
    %c0_i32_1 = arith.constant 0 : i32
    return %c0_i32, %c0_i32_0 : i32, i32
  }
  func.func @transform_14(%arg0: i32) -> (i32, i32) {
    %c0_i32 = arith.constant 0 : i32
    %c0_i32_0 = arith.constant 0 : i32
    %c0_i32_1 = arith.constant 0 : i32
    return %c0_i32, %c0_i32_0 : i32, i32
  }
  func.func @transform_15(%arg0: i32) -> (i32, i32) {
    %c0_i32 = arith.constant 0 : i32
    %c0_i32_0 = arith.constant 0 : i32
    %c0_i32_1 = arith.constant 0 : i32
    return %c0_i32, %c0_i32_0 : i32, i32
  }
  func.func @transform_16(%arg0: i32) -> (i32, i32) {
    %c0_i32 = arith.constant 0 : i32
    %c0_i32_0 = arith.constant 0 : i32
    %c0_i32_1 = arith.constant 0 : i32
    return %c0_i32, %c0_i32_0 : i32, i32
  }
  func.func @transform_17(%arg0: i32) -> (i32, i32) {
    %c0_i32 = arith.constant 0 : i32
    %c0_i32_0 = arith.constant 0 : i32
    return %c0_i32, %arg0 : i32, i32
  }
}

</mosaic_0001>

<llo_original>
// kernel: postprocess_net_simple.1
$region0: #{postprocess_net_simple.1}
  #allocation0 [shape = 'u32[]', space=smem, size = 0x4, offset = 0x4, fixed_abs, tag = 'smem constant byte address 0x4 - core index']
  #allocation1 [shape = 'u32[72,128]{1,0:T(1,128)}', space=vmem, size = 0x9000, scoped, tag = 'internal scratch']
  %s0 = inlined_call_operand.vmem [shape: f32[2,16,96], index: 0, kind: input, shape index: {}]
  %s1 = inlined_call_operand.vmem [shape: f32[96,96], index: 1, kind: input, shape index: {}]
  %s2 = inlined_call_operand.vmem [shape: f32[1,96], index: 2, kind: input, shape index: {}]
  %s3 = inlined_call_operand.vmem [shape: f32[96,384], index: 3, kind: input, shape index: {}]
  %s4 = inlined_call_operand.vmem [shape: f32[1,384], index: 4, kind: input, shape index: {}]
  %s5 = inlined_call_operand.vmem [shape: f32[128,96], index: 5, kind: input, shape index: {}]
  %s6 = inlined_call_operand.vmem [shape: f32[1,96], index: 6, kind: input, shape index: {}]
  %s7 = inlined_call_operand.vmem [shape: f32[1,96], index: 7, kind: input, shape index: {}]
  %s8 = inlined_call_operand.vmem [shape: f32[1,96], index: 8, kind: input, shape index: {}]
  %s9 = inlined_call_operand.vmem [shape: f32[96,512], index: 9, kind: input, shape index: {}]
  %s10 = inlined_call_operand.vmem [shape: f32[1,512], index: 10, kind: input, shape index: {}]
  %s11 = inlined_call_operand.vmem [shape: f32[512,96], index: 11, kind: input, shape index: {}]
  %s12 = inlined_call_operand.vmem [shape: f32[1,96], index: 12, kind: input, shape index: {}]
  %s13 = inlined_call_operand.vmem [shape: f32[1,96], index: 13, kind: input, shape index: {}]
  %s14 = inlined_call_operand.vmem [shape: f32[1,96], index: 14, kind: input, shape index: {}]
  %s15 = inlined_call_operand.vmem [shape: f32[5,96], index: 15, kind: input, shape index: {}]
  %s16 = inlined_call_operand.vmem [shape: f32[5,1], index: 16, kind: input, shape index: {}]
  %s17 = inlined_call_operand.vmem [shape: f32[5,32], index: 17, kind: output, shape index: {}]
  %s18 = sld [smem:[#allocation0]]
  $region78: #{postprocess_net_simple.1} parent=0
    _
  %s20 = ssub.s32 1, %s18
  %s21 = scalar_select 0, %s20, %s18
  // Predicated region
  $region2: #{postprocess_net_simple.1} parent=0 // pred_check
    _
  $region3: #{postprocess_net_simple.1} parent=0 // pred_check_branch
    %23 = sbr.rel (0) target = $region5
  $region4: #{postprocess_net_simple.1} parent=0 // pred_region
    _
  $region5: #{postprocess_net_simple.1} parent=0 // pred_fallthru
    _
  // Predicated region
  $region6: #{postprocess_net_simple.1} parent=0 // pred_check
    _
  $region7: #{postprocess_net_simple.1} parent=0 // pred_check_branch
    %25 = sbr.rel (0) target = $region9
  $region8: #{postprocess_net_simple.1} parent=0 // pred_region
    _
  $region9: #{postprocess_net_simple.1} parent=0 // pred_fallthru
    _
  // Predicated region
  $region10: #{postprocess_net_simple.1} parent=0 // pred_check
    _
  $region11: #{postprocess_net_simple.1} parent=0 // pred_check_branch
    %27 = sbr.rel (0) target = $region13
  $region12: #{postprocess_net_simple.1} parent=0 // pred_region
    _
  $region13: #{postprocess_net_simple.1} parent=0 // pred_fallthru
    _
  // Predicated region
  $region14: #{postprocess_net_simple.1} parent=0 // pred_check
    _
  $region15: #{postprocess_net_simple.1} parent=0 // pred_check_branch
    %29 = sbr.rel (0) target = $region17
  $region16: #{postprocess_net_simple.1} parent=0 // pred_region
    _
  $region17: #{postprocess_net_simple.1} parent=0 // pred_fallthru
    _
  // Predicated region
  $region18: #{postprocess_net_simple.1} parent=0 // pred_check
    _
  $region19: #{postprocess_net_simple.1} parent=0 // pred_check_branch
    %31 = sbr.rel (0) target = $region21
  $region20: #{postprocess_net_simple.1} parent=0 // pred_region
    _
  $region21: #{postprocess_net_simple.1} parent=0 // pred_fallthru
    _
  // Predicated region
  $region22: #{postprocess_net_simple.1} parent=0 // pred_check
    _
  $region23: #{postprocess_net_simple.1} parent=0 // pred_check_branch
    %33 = sbr.rel (0) target = $region25
  $region24: #{postprocess_net_simple.1} parent=0 // pred_region
    _
  $region25: #{postprocess_net_simple.1} parent=0 // pred_fallthru
    _
  // Predicated region
  $region26: #{postprocess_net_simple.1} parent=0 // pred_check
    _
  $region27: #{postprocess_net_simple.1} parent=0 // pred_check_branch
    %35 = sbr.rel (0) target = $region29
  $region28: #{postprocess_net_simple.1} parent=0 // pred_region
    _
  $region29: #{postprocess_net_simple.1} parent=0 // pred_fallthru
    _
  // Predicated region
  $region30: #{postprocess_net_simple.1} parent=0 // pred_check
    _
  $region31: #{postprocess_net_simple.1} parent=0 // pred_check_branch
    %37 = sbr.rel (0) target = $region33
  $region32: #{postprocess_net_simple.1} parent=0 // pred_region
    _
  $region33: #{postprocess_net_simple.1} parent=0 // pred_fallthru
    _
  // Predicated region
  $region34: #{postprocess_net_simple.1} parent=0 // pred_check
    _
  $region35: #{postprocess_net_simple.1} parent=0 // pred_check_branch
    %39 = sbr.rel (0) target = $region37
  $region36: #{postprocess_net_simple.1} parent=0 // pred_region
    _
  $region37: #{postprocess_net_simple.1} parent=0 // pred_fallthru
    _
  // Predicated region
  $region38: #{postprocess_net_simple.1} parent=0 // pred_check
    _
  $region39: #{postprocess_net_simple.1} parent=0 // pred_check_branch
    %41 = sbr.rel (0) target = $region41
  $region40: #{postprocess_net_simple.1} parent=0 // pred_region
    _
  $region41: #{postprocess_net_simple.1} parent=0 // pred_fallthru
    _
  // Predicated region
  $region42: #{postprocess_net_simple.1} parent=0 // pred_check
    _
  $region43: #{postprocess_net_simple.1} parent=0 // pred_check_branch
    %43 = sbr.rel (0) target = $region45
  $region44: #{postprocess_net_simple.1} parent=0 // pred_region
    _
  $region45: #{postprocess_net_simple.1} parent=0 // pred_fallthru
    _
  // Predicated region
  $region46: #{postprocess_net_simple.1} parent=0 // pred_check
    _
  $region47: #{postprocess_net_simple.1} parent=0 // pred_check_branch
    %45 = sbr.rel (0) target = $region49
  $region48: #{postprocess_net_simple.1} parent=0 // pred_region
    _
  $region49: #{postprocess_net_simple.1} parent=0 // pred_fallthru
    _
  // Predicated region
  $region50: #{postprocess_net_simple.1} parent=0 // pred_check
    _
  $region51: #{postprocess_net_simple.1} parent=0 // pred_check_branch
    %47 = sbr.rel (0) target = $region53
  $region52: #{postprocess_net_simple.1} parent=0 // pred_region
    _
  $region53: #{postprocess_net_simple.1} parent=0 // pred_fallthru
    _
  // Predicated region
  $region54: #{postprocess_net_simple.1} parent=0 // pred_check
    _
  $region55: #{postprocess_net_simple.1} parent=0 // pred_check_branch
    %49 = sbr.rel (0) target = $region57
  $region56: #{postprocess_net_simple.1} parent=0 // pred_region
    _
  $region57: #{postprocess_net_simple.1} parent=0 // pred_fallthru
    _
  // Predicated region
  $region58: #{postprocess_net_simple.1} parent=0 // pred_check
    _
  $region59: #{postprocess_net_simple.1} parent=0 // pred_check_branch
    %51 = sbr.rel (0) target = $region61
  $region60: #{postprocess_net_simple.1} parent=0 // pred_region
    _
  $region61: #{postprocess_net_simple.1} parent=0 // pred_fallthru
    _
  // Predicated region
  $region62: #{postprocess_net_simple.1} parent=0 // pred_check
    _
  $region63: #{postprocess_net_simple.1} parent=0 // pred_check_branch
    %53 = sbr.rel (0) target = $region65
  $region64: #{postprocess_net_simple.1} parent=0 // pred_region
    _
  $region65: #{postprocess_net_simple.1} parent=0 // pred_fallthru
    _
  // Predicated region
  $region66: #{postprocess_net_simple.1} parent=0 // pred_check
    _
  $region67: #{postprocess_net_simple.1} parent=0 // pred_check_branch
    %55 = sbr.rel (0) target = $region69
  $region68: #{postprocess_net_simple.1} parent=0 // pred_region
    _
  $region69: #{postprocess_net_simple.1} parent=0 // pred_fallthru
    _
  %v56 = vld [vmem:[%s0] sm:$0xff]
  %v57 = vld [vmem:[%s0 + $0x8] sm:$0xff]
  %v58 = vld [vmem:[%s0 + $0x10] sm:$0xff]
  %v59 = vld [vmem:[%s0 + $0x18] sm:$0xff]
  %v60 = vld [vmem:[%s1] sm:$0xff]
  %v61 = vld [vmem:[%s1 + $0x8] sm:$0xff]
  %v62 = vld [vmem:[%s1 + $0x10] sm:$0xff]
  %v63 = vld [vmem:[%s1 + $0x18] sm:$0xff]
  %v64 = vld [vmem:[%s1 + $0x20] sm:$0xff]
  %v65 = vld [vmem:[%s1 + $0x28] sm:$0xff]
  %v66 = vld [vmem:[%s1 + $0x30] sm:$0xff]
  %v67 = vld [vmem:[%s1 + $0x38] sm:$0xff]
  %v68 = vld [vmem:[%s1 + $0x40] sm:$0xff]
  %v69 = vld [vmem:[%s1 + $0x48] sm:$0xff]
  %v70 = vld [vmem:[%s1 + $0x50] sm:$0xff]
  %v71 = vld [vmem:[%s1 + $0x58] sm:$0xff]
  %v72 = vld [vmem:[%s2] sm:$0x1]
  %v74 = vperm.slane %v72, 0
  %vm76 = vcmask 785408
  %v78 = vsel %vm76, %v56, 0
  %v81 = vsel %vm76, %v57, 0
  %v84 = vsel %vm76, %v58, 0
  %v87 = vsel %vm76, %v59, 0
  %89 = vmatpush.msra.mxu0 0.0
  %90 = vmatpush.msra.mxu0 0.0
  %91 = vmatpush.msra.mxu0 0.0
  %92 = vmatpush.msra.mxu0 0.0
  %93 = vmatpush.msra.mxu0 %v71
  %94 = vmatpush.msra.mxu0 %v70
  %95 = vmatpush.msra.mxu0 %v69
  %96 = vmatpush.msra.mxu0 %v68
  %97 = vmatpush.msra.mxu0 %v67
  %98 = vmatpush.msra.mxu0 %v66
  %99 = vmatpush.msra.mxu0 %v65
  %100 = vmatpush.msra.mxu0 %v64
  %101 = vmatpush.msra.mxu0 %v63
  %102 = vmatpush.msra.mxu0 %v62
  %103 = vmatpush.msra.mxu0 %v61
  %104 = vmatpush.msra.mxu0 %v60
  %105 = vmatmul.f32.gmra.mxu0 %v78
  %v106 = vpop.f32.mrf.mxu0
  %v107 = vadd.f32 %v74, %v106
  %108 = vmatmul.f32.gmra.mxu0 %v81
  %v109 = vpop.f32.mrf.mxu0
  %v110 = vadd.f32 %v74, %v109
  %111 = vmatmul.f32.gmra.mxu0 %v84
  %v112 = vpop.f32.mrf.mxu0
  %v113 = vadd.f32 %v74, %v112
  %114 = vmatmul.f32.gmra.mxu0 %v87
  %v115 = vpop.f32.mrf.mxu0
  %v116 = vadd.f32 %v74, %v115
  %117 = vdwg.mxu0
  %v118 = vld [vmem:[%s3] sm:$0xff]
  %v119 = vld [vmem:[%s3 + $0x8] sm:$0xff]
  %v120 = vld [vmem:[%s3 + $0x10] sm:$0xff]
  %v121 = vld [vmem:[%s3 + $0x18] sm:$0xff]
  %v122 = vld [vmem:[%s3 + $0x20] sm:$0xff]
  %v123 = vld [vmem:[%s3 + $0x28] sm:$0xff]
  %v124 = vld [vmem:[%s3 + $0x30] sm:$0xff]
  %v125 = vld [vmem:[%s3 + $0x38] sm:$0xff]
  %v126 = vld [vmem:[%s3 + $0x40] sm:$0xff]
  %v127 = vld [vmem:[%s3 + $0x48] sm:$0xff]
  %v128 = vld [vmem:[%s3 + $0x50] sm:$0xff]
  %v129 = vld [vmem:[%s3 + $0x58] sm:$0xff]
  %v130 = vld [vmem:[%s3 + $0x60] sm:$0xff]
  %v131 = vld [vmem:[%s3 + $0x68] sm:$0xff]
  %v132 = vld [vmem:[%s3 + $0x70] sm:$0xff]
  %v133 = vld [vmem:[%s3 + $0x78] sm:$0xff]
  %v134 = vld [vmem:[%s3 + $0x80] sm:$0xff]
  %v135 = vld [vmem:[%s3 + $0x88] sm:$0xff]
  %v136 = vld [vmem:[%s3 + $0x90] sm:$0xff]
  %v137 = vld [vmem:[%s3 + $0x98] sm:$0xff]
  %v138 = vld [vmem:[%s3 + $0xa0] sm:$0xff]
  %v139 = vld [vmem:[%s3 + $0xa8] sm:$0xff]
  %v140 = vld [vmem:[%s3 + $0xb0] sm:$0xff]
  %v141 = vld [vmem:[%s3 + $0xb8] sm:$0xff]
  %v142 = vld [vmem:[%s3 + $0xc0] sm:$0xff]
  %v143 = vld [vmem:[%s3 + $0xc8] sm:$0xff]
  %v144 = vld [vmem:[%s3 + $0xd0] sm:$0xff]
  %v145 = vld [vmem:[%s3 + $0xd8] sm:$0xff]
  %v146 = vld [vmem:[%s3 + $0xe0] sm:$0xff]
  %v147 = vld [vmem:[%s3 + $0xe8] sm:$0xff]
  %v148 = vld [vmem:[%s3 + $0xf0] sm:$0xff]
  %v149 = vld [vmem:[%s3 + $0xf8] sm:$0xff]
  %v150 = vld [vmem:[%s3 + $0x100] sm:$0xff]
  %v151 = vld [vmem:[%s3 + $0x108] sm:$0xff]
  %v152 = vld [vmem:[%s3 + $0x110] sm:$0xff]
  %v153 = vld [vmem:[%s3 + $0x118] sm:$0xff]
  %v154 = vld [vmem:[%s4] sm:$0x7]
  %v156 = vperm.slane %v154, 0
  %v157 = vperm.slane %v154, 1
  %v158 = vperm.slane %v154, 2
  %v163 = vsel %vm76, %v107, 0
  %v166 = vsel %vm76, %v110, 0
  %v169 = vsel %vm76, %v113, 0
  %v172 = vsel %vm76, %v116, 0
  %174 = vmatpush.msra.mxu0 0.0
  %175 = vmatpush.msra.mxu0 0.0
  %176 = vmatpush.msra.mxu0 0.0
  %177 = vmatpush.msra.mxu0 0.0
  %178 = vmatpush.msra.mxu0 %v151
  %179 = vmatpush.msra.mxu0 %v148
  %180 = vmatpush.msra.mxu0 %v145
  %181 = vmatpush.msra.mxu0 %v142
  %182 = vmatpush.msra.mxu0 %v139
  %183 = vmatpush.msra.mxu0 %v136
  %184 = vmatpush.msra.mxu0 %v133
  %185 = vmatpush.msra.mxu0 %v130
  %186 = vmatpush.msra.mxu0 %v127
  %187 = vmatpush.msra.mxu0 %v124
  %188 = vmatpush.msra.mxu0 %v121
  %189 = vmatpush.msra.mxu0 %v118
  %190 = vmatmul.f32.gmra.mxu0 %v163
  %v191 = vpop.f32.mrf.mxu0
  %v192 = vadd.f32 %v156, %v191
  %193 = vmatmul.f32.gmra.mxu0 %v166
  %v194 = vpop.f32.mrf.mxu0
  %v195 = vadd.f32 %v156, %v194
  %196 = vmatmul.f32.gmra.mxu0 %v169
  %v197 = vpop.f32.mrf.mxu0
  %v198 = vadd.f32 %v156, %v197
  %199 = vmatmul.f32.gmra.mxu0 %v172
  %v200 = vpop.f32.mrf.mxu0
  %v201 = vadd.f32 %v156, %v200
  %202 = vdwg.mxu0
  %203 = vmatpush.msra.mxu0 0.0
  %204 = vmatpush.msra.mxu0 0.0
  %205 = vmatpush.msra.mxu0 0.0
  %206 = vmatpush.msra.mxu0 0.0
  %207 = vmatpush.msra.mxu0 %v152
  %208 = vmatpush.msra.mxu0 %v149
  %209 = vmatpush.msra.mxu0 %v146
  %210 = vmatpush.msra.mxu0 %v143
  %211 = vmatpush.msra.mxu0 %v140
  %212 = vmatpush.msra.mxu0 %v137
  %213 = vmatpush.msra.mxu0 %v134
  %214 = vmatpush.msra.mxu0 %v131
  %215 = vmatpush.msra.mxu0 %v128
  %216 = vmatpush.msra.mxu0 %v125
  %217 = vmatpush.msra.mxu0 %v122
  %218 = vmatpush.msra.mxu0 %v119
  %219 = vmatmul.f32.gmra.mxu0 %v163
  %v220 = vpop.f32.mrf.mxu0
  %v221 = vadd.f32 %v157, %v220
  %222 = vmatmul.f32.gmra.mxu0 %v166
  %v223 = vpop.f32.mrf.mxu0
  %v224 = vadd.f32 %v157, %v223
  %225 = vmatmul.f32.gmra.mxu0 %v169
  %v226 = vpop.f32.mrf.mxu0
  %v227 = vadd.f32 %v157, %v226
  %228 = vmatmul.f32.gmra.mxu0 %v172
  %v229 = vpop.f32.mrf.mxu0
  %v230 = vadd.f32 %v157, %v229
  %231 = vdwg.mxu0
  %232 = vmatpush.msra.mxu0 0.0
  %233 = vmatpush.msra.mxu0 0.0
  %234 = vmatpush.msra.mxu0 0.0
  %235 = vmatpush.msra.mxu0 0.0
  %236 = vmatpush.msra.mxu0 %v153
  %237 = vmatpush.msra.mxu0 %v150
  %238 = vmatpush.msra.mxu0 %v147
  %239 = vmatpush.msra.mxu0 %v144
  %240 = vmatpush.msra.mxu0 %v141
  %241 = vmatpush.msra.mxu0 %v138
  %242 = vmatpush.msra.mxu0 %v135
  %243 = vmatpush.msra.mxu0 %v132
  %244 = vmatpush.msra.mxu0 %v129
  %245 = vmatpush.msra.mxu0 %v126
  %246 = vmatpush.msra.mxu0 %v123
  %247 = vmatpush.msra.mxu0 %v120
  %248 = vmatmul.f32.gmra.mxu0 %v163
  %v249 = vpop.f32.mrf.mxu0
  %v250 = vadd.f32 %v158, %v249
  %251 = vmatmul.f32.gmra.mxu0 %v166
  %v252 = vpop.f32.mrf.mxu0
  %v253 = vadd.f32 %v158, %v252
  %254 = vmatmul.f32.gmra.mxu0 %v169
  %v255 = vpop.f32.mrf.mxu0
  %v256 = vadd.f32 %v158, %v255
  %257 = vmatmul.f32.gmra.mxu0 %v172
  %v258 = vpop.f32.mrf.mxu0
  %v259 = vadd.f32 %v158, %v258
  %260 = vdwg.mxu0
  %vm261 = vcmask 261120
  %v263 = vsel %vm261, %v192, 0
  %v266 = vsel %vm261, %v195, 0
  %v269 = vsel %vm261, %v221, 0
  %v272 = vsel %vm261, %v224, 0
  %274 = vmatpush.xpose.msra.mxu0 0.0
  %275 = vmatpush.xpose.msra.mxu0 0.0
  %276 = vmatpush.xpose.msra.mxu0 0.0
  %277 = vmatpush.xpose.msra.mxu0 0.0
  %278 = vmatpush.xpose.msra.mxu0 0.0
  %279 = vmatpush.xpose.msra.mxu0 0.0
  %280 = vmatpush.xpose.msra.mxu0 0.0
  %281 = vmatpush.xpose.msra.mxu0 0.0
  %282 = vmatpush.xpose.msra.mxu0 0.0
  %283 = vmatpush.xpose.msra.mxu0 0.0
  %284 = vmatpush.xpose.msra.mxu0 0.0
  %285 = vmatpush.xpose.msra.mxu0 0.0
  %286 = vmatpush.xpose.msra.mxu0 0.0
  %287 = vmatpush.xpose.msra.mxu0 0.0
  %288 = vmatpush.xpose.msra.mxu0 %v272
  %289 = vmatpush.xpose.msra.mxu0 %v269
  %290 = vmatmul.f32.gmra.mxu0 %v263
  %v291 = vpop.f32.mrf.mxu0
  %v292 = vadd.f32 0.0, %v291
  %293 = vmatmul.f32.gmra.mxu0 %v266
  %v294 = vpop.f32.mrf.mxu0
  %v295 = vadd.f32 0.0, %v294
  %296 = vdwg.mxu0
  %v298 = vsel %vm261, %v198, 0
  %v301 = vsel %vm261, %v201, 0
  %v304 = vsel %vm261, %v227, 0
  %v307 = vsel %vm261, %v230, 0
  %309 = vmatpush.xpose.msra.mxu0 0.0
  %310 = vmatpush.xpose.msra.mxu0 0.0
  %311 = vmatpush.xpose.msra.mxu0 0.0
  %312 = vmatpush.xpose.msra.mxu0 0.0
  %313 = vmatpush.xpose.msra.mxu0 0.0
  %314 = vmatpush.xpose.msra.mxu0 0.0
  %315 = vmatpush.xpose.msra.mxu0 0.0
  %316 = vmatpush.xpose.msra.mxu0 0.0
  %317 = vmatpush.xpose.msra.mxu0 0.0
  %318 = vmatpush.xpose.msra.mxu0 0.0
  %319 = vmatpush.xpose.msra.mxu0 0.0
  %320 = vmatpush.xpose.msra.mxu0 0.0
  %321 = vmatpush.xpose.msra.mxu0 0.0
  %322 = vmatpush.xpose.msra.mxu0 0.0
  %323 = vmatpush.xpose.msra.mxu0 %v307
  %324 = vmatpush.xpose.msra.mxu0 %v304
  %325 = vmatmul.f32.gmra.mxu0 %v298
  %v326 = vpop.f32.mrf.mxu0
  %v327 = vadd.f32 0.0, %v326
  %328 = vmatmul.f32.gmra.mxu0 %v301
  %v329 = vpop.f32.mrf.mxu0
  %v330 = vadd.f32 0.0, %v329
  %331 = vdwg.mxu0
  %v332 = vmul.f32 %v292, 0.20412415
  %v333 = vmul.f32 %v295, 0.20412415
  %v334 = vmul.f32 %v327, 0.20412415
  %v335 = vmul.f32 %v330, 0.20412415
  %vm336 = vcmask 130048
  %v337 = vsel %vm336, %v332, -inf
  %338 = vmax.xlane.f32.xlu0 %v337
  %v339 = vpop.xlane.xlu0 %338
  %v340 = vsel %vm336, %v333, -inf
  %341 = vmax.xlane.f32.xlu0 %v340
  %v342 = vpop.xlane.xlu0 %341
  %v343 = vsel %vm336, %v334, -inf
  %344 = vmax.xlane.f32.xlu0 %v343
  %v345 = vpop.xlane.xlu0 %344
  %v346 = vsel %vm336, %v335, -inf
  %347 = vmax.xlane.f32.xlu0 %v346
  %v348 = vpop.xlane.xlu0 %347
  %v349 = vsub.f32 %v332, %v339
  %v350 = vsub.f32 %v333, %v342
  %v351 = vsub.f32 %v334, %v345
  %v352 = vsub.f32 %v335, %v348
  %v353 = vmul.f32 %v349, 1.442695
  %v354 = vpow.pop %v353
  %v355 = vmul.f32 %v350, 1.442695
  %v356 = vpow.pop %v355
  %v357 = vmul.f32 %v351, 1.442695
  %v358 = vpow.pop %v357
  %v359 = vmul.f32 %v352, 1.442695
  %v360 = vpow.pop %v359
  %v361 = vsel %vm336, %v354, 0.0
  %362 = vadd.xlane.f32.xlu0 %v361
  %v363 = vpop.xlane.xlu0 %362
  %v364 = vsel %vm336, %v356, 0.0
  %365 = vadd.xlane.f32.xlu0 %v364
  %v366 = vpop.xlane.xlu0 %365
  %v367 = vsel %vm336, %v358, 0.0
  %368 = vadd.xlane.f32.xlu0 %v367
  %v369 = vpop.xlane.xlu0 %368
  %v370 = vsel %vm336, %v360, 0.0
  %371 = vadd.xlane.f32.xlu0 %v370
  %v372 = vpop.xlane.xlu0 %371
  %v373 = vrcp.pop %v363
  %v374 = vrcp.pop %v366
  %v375 = vrcp.pop %v369
  %v376 = vrcp.pop %v372
  %v377 = vmul.f32 %v354, %v373
  %v378 = vmul.f32 %v356, %v374
  %v379 = vmul.f32 %v358, %v375
  %v380 = vmul.f32 %v360, %v376
  %v382 = vsel %vm336, %v377, 0
  %v385 = vsel %vm336, %v378, 0
  %387 = vmatpush.msra.mxu0 0.0
  %388 = vmatpush.msra.mxu0 0.0
  %389 = vmatpush.msra.mxu0 0.0
  %390 = vmatpush.msra.mxu0 0.0
  %391 = vmatpush.msra.mxu0 0.0
  %392 = vmatpush.msra.mxu0 0.0
  %393 = vmatpush.msra.mxu0 0.0
  %394 = vmatpush.msra.mxu0 0.0
  %395 = vmatpush.msra.mxu0 0.0
  %396 = vmatpush.msra.mxu0 0.0
  %397 = vmatpush.msra.mxu0 0.0
  %398 = vmatpush.msra.mxu0 0.0
  %399 = vmatpush.msra.mxu0 0.0
  %400 = vmatpush.msra.mxu0 0.0
  %401 = vmatpush.msra.mxu0 %v253
  %402 = vmatpush.msra.mxu0 %v250
  %403 = vmatmul.f32.gmra.mxu0 %v382
  %v404 = vpop.f32.mrf.mxu0
  %v405 = vadd.f32 0.0, %v404
  %406 = vmatmul.f32.gmra.mxu0 %v385
  %v407 = vpop.f32.mrf.mxu0
  %v408 = vadd.f32 0.0, %v407
  %409 = vdwg.mxu0
  %v411 = vsel %vm336, %v379, 0
  %v414 = vsel %vm336, %v380, 0
  %416 = vmatpush.msra.mxu0 0.0
  %417 = vmatpush.msra.mxu0 0.0
  %418 = vmatpush.msra.mxu0 0.0
  %419 = vmatpush.msra.mxu0 0.0
  %420 = vmatpush.msra.mxu0 0.0
  %421 = vmatpush.msra.mxu0 0.0
  %422 = vmatpush.msra.mxu0 0.0
  %423 = vmatpush.msra.mxu0 0.0
  %424 = vmatpush.msra.mxu0 0.0
  %425 = vmatpush.msra.mxu0 0.0
  %426 = vmatpush.msra.mxu0 0.0
  %427 = vmatpush.msra.mxu0 0.0
  %428 = vmatpush.msra.mxu0 0.0
  %429 = vmatpush.msra.mxu0 0.0
  %430 = vmatpush.msra.mxu0 %v259
  %431 = vmatpush.msra.mxu0 %v256
  %432 = vmatmul.f32.gmra.mxu0 %v411
  %v433 = vpop.f32.mrf.mxu0
  %v434 = vadd.f32 0.0, %v433
  %435 = vmatmul.f32.gmra.mxu0 %v414
  %v436 = vpop.f32.mrf.mxu0
  %v437 = vadd.f32 0.0, %v436
  %438 = vdwg.mxu0
  %439 = vrot.lane.b32.xlu0 %v192, 96
  %v440 = vpop.permute.xlu0 %439
  %441 = vrot.lane.b32.xlu0 %v195, 96
  %v442 = vpop.permute.xlu0 %441
  %443 = vrot.lane.b32.xlu0 %v221, 96
  %v444 = vpop.permute.xlu0 %443
  %445 = vrot.lane.b32.xlu0 %v224, 96
  %v446 = vpop.permute.xlu0 %445
  %v447 = vsel %vm261, %v440, 0
  %v449 = vsel %vm261, %v442, 0
  %v451 = vsel %vm261, %v444, 0
  %v453 = vsel %vm261, %v446, 0
  %455 = vmatpush.xpose.msra.mxu0 0.0
  %456 = vmatpush.xpose.msra.mxu0 0.0
  %457 = vmatpush.xpose.msra.mxu0 0.0
  %458 = vmatpush.xpose.msra.mxu0 0.0
  %459 = vmatpush.xpose.msra.mxu0 0.0
  %460 = vmatpush.xpose.msra.mxu0 0.0
  %461 = vmatpush.xpose.msra.mxu0 0.0
  %462 = vmatpush.xpose.msra.mxu0 0.0
  %463 = vmatpush.xpose.msra.mxu0 0.0
  %464 = vmatpush.xpose.msra.mxu0 0.0
  %465 = vmatpush.xpose.msra.mxu0 0.0
  %466 = vmatpush.xpose.msra.mxu0 0.0
  %467 = vmatpush.xpose.msra.mxu0 0.0
  %468 = vmatpush.xpose.msra.mxu0 0.0
  %469 = vmatpush.xpose.msra.mxu0 %v453
  %470 = vmatpush.xpose.msra.mxu0 %v451
  %471 = vmatmul.f32.gmra.mxu0 %v447
  %v472 = vpop.f32.mrf.mxu0
  %v473 = vadd.f32 0.0, %v472
  %474 = vmatmul.f32.gmra.mxu0 %v449
  %v475 = vpop.f32.mrf.mxu0
  %v476 = vadd.f32 0.0, %v475
  %477 = vdwg.mxu0
  %478 = vrot.lane.b32.xlu0 %v198, 96
  %v479 = vpop.permute.xlu0 %478
  %480 = vrot.lane.b32.xlu0 %v201, 96
  %v481 = vpop.permute.xlu0 %480
  %482 = vrot.lane.b32.xlu0 %v227, 96
  %v483 = vpop.permute.xlu0 %482
  %484 = vrot.lane.b32.xlu0 %v230, 96
  %v485 = vpop.permute.xlu0 %484
  %v486 = vsel %vm261, %v479, 0
  %v488 = vsel %vm261, %v481, 0
  %v490 = vsel %vm261, %v483, 0
  %v492 = vsel %vm261, %v485, 0
  %494 = vmatpush.xpose.msra.mxu0 0.0
  %495 = vmatpush.xpose.msra.mxu0 0.0
  %496 = vmatpush.xpose.msra.mxu0 0.0
  %497 = vmatpush.xpose.msra.mxu0 0.0
  %498 = vmatpush.xpose.msra.mxu0 0.0
  %499 = vmatpush.xpose.msra.mxu0 0.0
  %500 = vmatpush.xpose.msra.mxu0 0.0
  %501 = vmatpush.xpose.msra.mxu0 0.0
  %502 = vmatpush.xpose.msra.mxu0 0.0
  %503 = vmatpush.xpose.msra.mxu0 0.0
  %504 = vmatpush.xpose.msra.mxu0 0.0
  %505 = vmatpush.xpose.msra.mxu0 0.0
  %506 = vmatpush.xpose.msra.mxu0 0.0
  %507 = vmatpush.xpose.msra.mxu0 0.0
  %508 = vmatpush.xpose.msra.mxu0 %v492
  %509 = vmatpush.xpose.msra.mxu0 %v490
  %510 = vmatmul.f32.gmra.mxu0 %v486
  %v511 = vpop.f32.mrf.mxu0
  %v512 = vadd.f32 0.0, %v511
  %513 = vmatmul.f32.gmra.mxu0 %v488
  %v514 = vpop.f32.mrf.mxu0
  %v515 = vadd.f32 0.0, %v514
  %516 = vdwg.mxu0
  %v517 = vmul.f32 %v473, 0.20412415
  %v518 = vmul.f32 %v476, 0.20412415
  %v519 = vmul.f32 %v512, 0.20412415
  %v520 = vmul.f32 %v515, 0.20412415
  %v521 = vsel %vm336, %v517, -inf
  %522 = vmax.xlane.f32.xlu0 %v521
  %v523 = vpop.xlane.xlu0 %522
  %v524 = vsel %vm336, %v518, -inf
  %525 = vmax.xlane.f32.xlu0 %v524
  %v526 = vpop.xlane.xlu0 %525
  %v527 = vsel %vm336, %v519, -inf
  %528 = vmax.xlane.f32.xlu0 %v527
  %v529 = vpop.xlane.xlu0 %528
  %v530 = vsel %vm336, %v520, -inf
  %531 = vmax.xlane.f32.xlu0 %v530
  %v532 = vpop.xlane.xlu0 %531
  %v533 = vsub.f32 %v517, %v523
  %v534 = vsub.f32 %v518, %v526
  %v535 = vsub.f32 %v519, %v529
  %v536 = vsub.f32 %v520, %v532
  %v537 = vmul.f32 %v533, 1.442695
  %v538 = vpow.pop %v537
  %v539 = vmul.f32 %v534, 1.442695
  %v540 = vpow.pop %v539
  %v541 = vmul.f32 %v535, 1.442695
  %v542 = vpow.pop %v541
  %v543 = vmul.f32 %v536, 1.442695
  %v544 = vpow.pop %v543
  %v545 = vsel %vm336, %v538, 0.0
  %546 = vadd.xlane.f32.xlu0 %v545
  %v547 = vpop.xlane.xlu0 %546
  %v548 = vsel %vm336, %v540, 0.0
  %549 = vadd.xlane.f32.xlu0 %v548
  %v550 = vpop.xlane.xlu0 %549
  %v551 = vsel %vm336, %v542, 0.0
  %552 = vadd.xlane.f32.xlu0 %v551
  %v553 = vpop.xlane.xlu0 %552
  %v554 = vsel %vm336, %v544, 0.0
  %555 = vadd.xlane.f32.xlu0 %v554
  %v556 = vpop.xlane.xlu0 %555
  %v557 = vrcp.pop %v547
  %v558 = vrcp.pop %v550
  %v559 = vrcp.pop %v553
  %v560 = vrcp.pop %v556
  %v561 = vmul.f32 %v538, %v557
  %v562 = vmul.f32 %v540, %v558
  %v563 = vmul.f32 %v542, %v559
  %v564 = vmul.f32 %v544, %v560
  %567 = vrot.lane.b32.xlu0 %v250, 96
  %v568 = vpop.permute.xlu0 %567
  %569 = vrot.lane.b32.xlu0 %v253, 96
  %v570 = vpop.permute.xlu0 %569
  %v574 = vsel %vm336, %v561, 0
  %v577 = vsel %vm336, %v562, 0
  %579 = vmatpush.msra.mxu0 0.0
  %580 = vmatpush.msra.mxu0 0.0
  %581 = vmatpush.msra.mxu0 0.0
  %582 = vmatpush.msra.mxu0 0.0
  %583 = vmatpush.msra.mxu0 0.0
  %584 = vmatpush.msra.mxu0 0.0
  %585 = vmatpush.msra.mxu0 0.0
  %586 = vmatpush.msra.mxu0 0.0
  %587 = vmatpush.msra.mxu0 0.0
  %588 = vmatpush.msra.mxu0 0.0
  %589 = vmatpush.msra.mxu0 0.0
  %590 = vmatpush.msra.mxu0 0.0
  %591 = vmatpush.msra.mxu0 0.0
  %592 = vmatpush.msra.mxu0 0.0
  %593 = vmatpush.msra.mxu0 %v570
  %594 = vmatpush.msra.mxu0 %v568
  %595 = vmatmul.f32.gmra.mxu0 %v574
  %v596 = vpop.f32.mrf.mxu0
  %v597 = vadd.f32 0.0, %v596
  %598 = vmatmul.f32.gmra.mxu0 %v577
  %v599 = vpop.f32.mrf.mxu0
  %v600 = vadd.f32 0.0, %v599
  %601 = vdwg.mxu0
  %604 = vrot.lane.b32.xlu0 %v256, 96
  %v605 = vpop.permute.xlu0 %604
  %606 = vrot.lane.b32.xlu0 %v259, 96
  %v607 = vpop.permute.xlu0 %606
  %v611 = vsel %vm336, %v563, 0
  %v614 = vsel %vm336, %v564, 0
  %616 = vmatpush.msra.mxu0 0.0
  %617 = vmatpush.msra.mxu0 0.0
  %618 = vmatpush.msra.mxu0 0.0
  %619 = vmatpush.msra.mxu0 0.0
  %620 = vmatpush.msra.mxu0 0.0
  %621 = vmatpush.msra.mxu0 0.0
  %622 = vmatpush.msra.mxu0 0.0
  %623 = vmatpush.msra.mxu0 0.0
  %624 = vmatpush.msra.mxu0 0.0
  %625 = vmatpush.msra.mxu0 0.0
  %626 = vmatpush.msra.mxu0 0.0
  %627 = vmatpush.msra.mxu0 0.0
  %628 = vmatpush.msra.mxu0 0.0
  %629 = vmatpush.msra.mxu0 0.0
  %630 = vmatpush.msra.mxu0 %v607
  %631 = vmatpush.msra.mxu0 %v605
  %632 = vmatmul.f32.gmra.mxu0 %v611
  %v633 = vpop.f32.mrf.mxu0
  %v634 = vadd.f32 0.0, %v633
  %635 = vmatmul.f32.gmra.mxu0 %v614
  %v636 = vpop.f32.mrf.mxu0
  %v637 = vadd.f32 0.0, %v636
  %638 = vdwg.mxu0
  %639 = vrot.lane.b32.xlu0 %v192, 64
  %v640 = vpop.permute.xlu0 %639
  %641 = vrot.lane.b32.xlu0 %v195, 64
  %v642 = vpop.permute.xlu0 %641
  %643 = vrot.lane.b32.xlu0 %v221, 64
  %v644 = vpop.permute.xlu0 %643
  %645 = vrot.lane.b32.xlu0 %v224, 64
  %v646 = vpop.permute.xlu0 %645
  %v647 = vsel %vm261, %v640, 0
  %v649 = vsel %vm261, %v642, 0
  %v651 = vsel %vm261, %v644, 0
  %v653 = vsel %vm261, %v646, 0
  %655 = vmatpush.xpose.msra.mxu0 0.0
  %656 = vmatpush.xpose.msra.mxu0 0.0
  %657 = vmatpush.xpose.msra.mxu0 0.0
  %658 = vmatpush.xpose.msra.mxu0 0.0
  %659 = vmatpush.xpose.msra.mxu0 0.0
  %660 = vmatpush.xpose.msra.mxu0 0.0
  %661 = vmatpush.xpose.msra.mxu0 0.0
  %662 = vmatpush.xpose.msra.mxu0 0.0
  %663 = vmatpush.xpose.msra.mxu0 0.0
  %664 = vmatpush.xpose.msra.mxu0 0.0
  %665 = vmatpush.xpose.msra.mxu0 0.0
  %666 = vmatpush.xpose.msra.mxu0 0.0
  %667 = vmatpush.xpose.msra.mxu0 0.0
  %668 = vmatpush.xpose.msra.mxu0 0.0
  %669 = vmatpush.xpose.msra.mxu0 %v653
  %670 = vmatpush.xpose.msra.mxu0 %v651
  %671 = vmatmul.f32.gmra.mxu0 %v647
  %v672 = vpop.f32.mrf.mxu0
  %v673 = vadd.f32 0.0, %v672
  %674 = vmatmul.f32.gmra.mxu0 %v649
  %v675 = vpop.f32.mrf.mxu0
  %v676 = vadd.f32 0.0, %v675
  %677 = vdwg.mxu0
  %678 = vrot.lane.b32.xlu0 %v198, 64
  %v679 = vpop.permute.xlu0 %678
  %680 = vrot.lane.b32.xlu0 %v201, 64
  %v681 = vpop.permute.xlu0 %680
  %682 = vrot.lane.b32.xlu0 %v227, 64
  %v683 = vpop.permute.xlu0 %682
  %684 = vrot.lane.b32.xlu0 %v230, 64
  %v685 = vpop.permute.xlu0 %684
  %v686 = vsel %vm261, %v679, 0
  %v688 = vsel %vm261, %v681, 0
  %v690 = vsel %vm261, %v683, 0
  %v692 = vsel %vm261, %v685, 0
  %694 = vmatpush.xpose.msra.mxu0 0.0
  %695 = vmatpush.xpose.msra.mxu0 0.0
  %696 = vmatpush.xpose.msra.mxu0 0.0
  %697 = vmatpush.xpose.msra.mxu0 0.0
  %698 = vmatpush.xpose.msra.mxu0 0.0
  %699 = vmatpush.xpose.msra.mxu0 0.0
  %700 = vmatpush.xpose.msra.mxu0 0.0
  %701 = vmatpush.xpose.msra.mxu0 0.0
  %702 = vmatpush.xpose.msra.mxu0 0.0
  %703 = vmatpush.xpose.msra.mxu0 0.0
  %704 = vmatpush.xpose.msra.mxu0 0.0
  %705 = vmatpush.xpose.msra.mxu0 0.0
  %706 = vmatpush.xpose.msra.mxu0 0.0
  %707 = vmatpush.xpose.msra.mxu0 0.0
  %708 = vmatpush.xpose.msra.mxu0 %v692
  %709 = vmatpush.xpose.msra.mxu0 %v690
  %710 = vmatmul.f32.gmra.mxu0 %v686
  %v711 = vpop.f32.mrf.mxu0
  %v712 = vadd.f32 0.0, %v711
  %713 = vmatmul.f32.gmra.mxu0 %v688
  %v714 = vpop.f32.mrf.mxu0
  %v715 = vadd.f32 0.0, %v714
  %716 = vdwg.mxu0
  %v717 = vmul.f32 %v673, 0.20412415
  %v718 = vmul.f32 %v676, 0.20412415
  %v719 = vmul.f32 %v712, 0.20412415
  %v720 = vmul.f32 %v715, 0.20412415
  %v721 = vsel %vm336, %v717, -inf
  %722 = vmax.xlane.f32.xlu0 %v721
  %v723 = vpop.xlane.xlu0 %722
  %v724 = vsel %vm336, %v718, -inf
  %725 = vmax.xlane.f32.xlu0 %v724
  %v726 = vpop.xlane.xlu0 %725
  %v727 = vsel %vm336, %v719, -inf
  %728 = vmax.xlane.f32.xlu0 %v727
  %v729 = vpop.xlane.xlu0 %728
  %v730 = vsel %vm336, %v720, -inf
  %731 = vmax.xlane.f32.xlu0 %v730
  %v732 = vpop.xlane.xlu0 %731
  %v733 = vsub.f32 %v717, %v723
  %v734 = vsub.f32 %v718, %v726
  %v735 = vsub.f32 %v719, %v729
  %v736 = vsub.f32 %v720, %v732
  %v737 = vmul.f32 %v733, 1.442695
  %v738 = vpow.pop %v737
  %v739 = vmul.f32 %v734, 1.442695
  %v740 = vpow.pop %v739
  %v741 = vmul.f32 %v735, 1.442695
  %v742 = vpow.pop %v741
  %v743 = vmul.f32 %v736, 1.442695
  %v744 = vpow.pop %v743
  %v745 = vsel %vm336, %v738, 0.0
  %746 = vadd.xlane.f32.xlu0 %v745
  %v747 = vpop.xlane.xlu0 %746
  %v748 = vsel %vm336, %v740, 0.0
  %749 = vadd.xlane.f32.xlu0 %v748
  %v750 = vpop.xlane.xlu0 %749
  %v751 = vsel %vm336, %v742, 0.0
  %752 = vadd.xlane.f32.xlu0 %v751
  %v753 = vpop.xlane.xlu0 %752
  %v754 = vsel %vm336, %v744, 0.0
  %755 = vadd.xlane.f32.xlu0 %v754
  %v756 = vpop.xlane.xlu0 %755
  %v757 = vrcp.pop %v747
  %v758 = vrcp.pop %v750
  %v759 = vrcp.pop %v753
  %v760 = vrcp.pop %v756
  %v761 = vmul.f32 %v738, %v757
  %v762 = vmul.f32 %v740, %v758
  %v763 = vmul.f32 %v742, %v759
  %v764 = vmul.f32 %v744, %v760
  %765 = vrot.lane.b32.xlu0 %v250, 64
  %v766 = vpop.permute.xlu0 %765
  %767 = vrot.lane.b32.xlu0 %v253, 64
  %v768 = vpop.permute.xlu0 %767
  %v772 = vsel %vm336, %v761, 0
  %v775 = vsel %vm336, %v762, 0
  %777 = vmatpush.msra.mxu0 0.0
  %778 = vmatpush.msra.mxu0 0.0
  %779 = vmatpush.msra.mxu0 0.0
  %780 = vmatpush.msra.mxu0 0.0
  %781 = vmatpush.msra.mxu0 0.0
  %782 = vmatpush.msra.mxu0 0.0
  %783 = vmatpush.msra.mxu0 0.0
  %784 = vmatpush.msra.mxu0 0.0
  %785 = vmatpush.msra.mxu0 0.0
  %786 = vmatpush.msra.mxu0 0.0
  %787 = vmatpush.msra.mxu0 0.0
  %788 = vmatpush.msra.mxu0 0.0
  %789 = vmatpush.msra.mxu0 0.0
  %790 = vmatpush.msra.mxu0 0.0
  %791 = vmatpush.msra.mxu0 %v768
  %792 = vmatpush.msra.mxu0 %v766
  %793 = vmatmul.f32.gmra.mxu0 %v772
  %v794 = vpop.f32.mrf.mxu0
  %v795 = vadd.f32 0.0, %v794
  %796 = vmatmul.f32.gmra.mxu0 %v775
  %v797 = vpop.f32.mrf.mxu0
  %v798 = vadd.f32 0.0, %v797
  %799 = vdwg.mxu0
  %800 = vrot.lane.b32.xlu0 %v256, 64
  %v801 = vpop.permute.xlu0 %800
  %802 = vrot.lane.b32.xlu0 %v259, 64
  %v803 = vpop.permute.xlu0 %802
  %v807 = vsel %vm336, %v763, 0
  %v810 = vsel %vm336, %v764, 0
  %812 = vmatpush.msra.mxu0 0.0
  %813 = vmatpush.msra.mxu0 0.0
  %814 = vmatpush.msra.mxu0 0.0
  %815 = vmatpush.msra.mxu0 0.0
  %816 = vmatpush.msra.mxu0 0.0
  %817 = vmatpush.msra.mxu0 0.0
  %818 = vmatpush.msra.mxu0 0.0
  %819 = vmatpush.msra.mxu0 0.0
  %820 = vmatpush.msra.mxu0 0.0
  %821 = vmatpush.msra.mxu0 0.0
  %822 = vmatpush.msra.mxu0 0.0
  %823 = vmatpush.msra.mxu0 0.0
  %824 = vmatpush.msra.mxu0 0.0
  %825 = vmatpush.msra.mxu0 0.0
  %826 = vmatpush.msra.mxu0 %v803
  %827 = vmatpush.msra.mxu0 %v801
  %828 = vmatmul.f32.gmra.mxu0 %v807
  %v829 = vpop.f32.mrf.mxu0
  %v830 = vadd.f32 0.0, %v829
  %831 = vmatmul.f32.gmra.mxu0 %v810
  %v832 = vpop.f32.mrf.mxu0
  %v833 = vadd.f32 0.0, %v832
  %834 = vdwg.mxu0
  %835 = vrot.lane.b32.xlu0 %v192, 32
  %v836 = vpop.permute.xlu0 %835
  %837 = vrot.lane.b32.xlu0 %v195, 32
  %v838 = vpop.permute.xlu0 %837
  %839 = vrot.lane.b32.xlu0 %v221, 32
  %v840 = vpop.permute.xlu0 %839
  %841 = vrot.lane.b32.xlu0 %v224, 32
  %v842 = vpop.permute.xlu0 %841
  %v843 = vsel %vm261, %v836, 0
  %v845 = vsel %vm261, %v838, 0
  %v847 = vsel %vm261, %v840, 0
  %v849 = vsel %vm261, %v842, 0
  %851 = vmatpush.xpose.msra.mxu0 0.0
  %852 = vmatpush.xpose.msra.mxu0 0.0
  %853 = vmatpush.xpose.msra.mxu0 0.0
  %854 = vmatpush.xpose.msra.mxu0 0.0
  %855 = vmatpush.xpose.msra.mxu0 0.0
  %856 = vmatpush.xpose.msra.mxu0 0.0
  %857 = vmatpush.xpose.msra.mxu0 0.0
  %858 = vmatpush.xpose.msra.mxu0 0.0
  %859 = vmatpush.xpose.msra.mxu0 0.0
  %860 = vmatpush.xpose.msra.mxu0 0.0
  %861 = vmatpush.xpose.msra.mxu0 0.0
  %862 = vmatpush.xpose.msra.mxu0 0.0
  %863 = vmatpush.xpose.msra.mxu0 0.0
  %864 = vmatpush.xpose.msra.mxu0 0.0
  %865 = vmatpush.xpose.msra.mxu0 %v849
  %866 = vmatpush.xpose.msra.mxu0 %v847
  %867 = vmatmul.f32.gmra.mxu0 %v843
  %v868 = vpop.f32.mrf.mxu0
  %v869 = vadd.f32 0.0, %v868
  %870 = vmatmul.f32.gmra.mxu0 %v845
  %v871 = vpop.f32.mrf.mxu0
  %v872 = vadd.f32 0.0, %v871
  %873 = vdwg.mxu0
  %874 = vrot.lane.b32.xlu0 %v198, 32
  %v875 = vpop.permute.xlu0 %874
  %876 = vrot.lane.b32.xlu0 %v201, 32
  %v877 = vpop.permute.xlu0 %876
  %878 = vrot.lane.b32.xlu0 %v227, 32
  %v879 = vpop.permute.xlu0 %878
  %880 = vrot.lane.b32.xlu0 %v230, 32
  %v881 = vpop.permute.xlu0 %880
  %v882 = vsel %vm261, %v875, 0
  %v884 = vsel %vm261, %v877, 0
  %v886 = vsel %vm261, %v879, 0
  %v888 = vsel %vm261, %v881, 0
  %890 = vmatpush.xpose.msra.mxu0 0.0
  %891 = vmatpush.xpose.msra.mxu0 0.0
  %892 = vmatpush.xpose.msra.mxu0 0.0
  %893 = vmatpush.xpose.msra.mxu0 0.0
  %894 = vmatpush.xpose.msra.mxu0 0.0
  %895 = vmatpush.xpose.msra.mxu0 0.0
  %896 = vmatpush.xpose.msra.mxu0 0.0
  %897 = vmatpush.xpose.msra.mxu0 0.0
  %898 = vmatpush.xpose.msra.mxu0 0.0
  %899 = vmatpush.xpose.msra.mxu0 0.0
  %900 = vmatpush.xpose.msra.mxu0 0.0
  %901 = vmatpush.xpose.msra.mxu0 0.0
  %902 = vmatpush.xpose.msra.mxu0 0.0
  %903 = vmatpush.xpose.msra.mxu0 0.0
  %904 = vmatpush.xpose.msra.mxu0 %v888
  %905 = vmatpush.xpose.msra.mxu0 %v886
  %906 = vmatmul.f32.gmra.mxu0 %v882
  %v907 = vpop.f32.mrf.mxu0
  %v908 = vadd.f32 0.0, %v907
  %909 = vmatmul.f32.gmra.mxu0 %v884
  %v910 = vpop.f32.mrf.mxu0
  %v911 = vadd.f32 0.0, %v910
  %912 = vdwg.mxu0
  %v913 = vmul.f32 %v869, 0.20412415
  %v914 = vmul.f32 %v872, 0.20412415
  %v915 = vmul.f32 %v908, 0.20412415
  %v916 = vmul.f32 %v911, 0.20412415
  %v917 = vsel %vm336, %v913, -inf
  %918 = vmax.xlane.f32.xlu0 %v917
  %v919 = vpop.xlane.xlu0 %918
  %v920 = vsel %vm336, %v914, -inf
  %921 = vmax.xlane.f32.xlu0 %v920
  %v922 = vpop.xlane.xlu0 %921
  %v923 = vsel %vm336, %v915, -inf
  %924 = vmax.xlane.f32.xlu0 %v923
  %v925 = vpop.xlane.xlu0 %924
  %v926 = vsel %vm336, %v916, -inf
  %927 = vmax.xlane.f32.xlu0 %v926
  %v928 = vpop.xlane.xlu0 %927
  %v929 = vsub.f32 %v913, %v919
  %v930 = vsub.f32 %v914, %v922
  %v931 = vsub.f32 %v915, %v925
  %v932 = vsub.f32 %v916, %v928
  %v933 = vmul.f32 %v929, 1.442695
  %v934 = vpow.pop %v933
  %v935 = vmul.f32 %v930, 1.442695
  %v936 = vpow.pop %v935
  %v937 = vmul.f32 %v931, 1.442695
  %v938 = vpow.pop %v937
  %v939 = vmul.f32 %v932, 1.442695
  %v940 = vpow.pop %v939
  %v941 = vsel %vm336, %v934, 0.0
  %942 = vadd.xlane.f32.xlu0 %v941
  %v943 = vpop.xlane.xlu0 %942
  %v944 = vsel %vm336, %v936, 0.0
  %945 = vadd.xlane.f32.xlu0 %v944
  %v946 = vpop.xlane.xlu0 %945
  %v947 = vsel %vm336, %v938, 0.0
  %948 = vadd.xlane.f32.xlu0 %v947
  %v949 = vpop.xlane.xlu0 %948
  %v950 = vsel %vm336, %v940, 0.0
  %951 = vadd.xlane.f32.xlu0 %v950
  %v952 = vpop.xlane.xlu0 %951
  %v953 = vrcp.pop %v943
  %v954 = vrcp.pop %v946
  %v955 = vrcp.pop %v949
  %v956 = vrcp.pop %v952
  %v957 = vmul.f32 %v934, %v953
  %v958 = vmul.f32 %v936, %v954
  %v959 = vmul.f32 %v938, %v955
  %v960 = vmul.f32 %v940, %v956
  %961 = vrot.lane.b32.xlu0 %v250, 32
  %v962 = vpop.permute.xlu0 %961
  %963 = vrot.lane.b32.xlu0 %v253, 32
  %v964 = vpop.permute.xlu0 %963
  %v968 = vsel %vm336, %v957, 0
  %v971 = vsel %vm336, %v958, 0
  %973 = vmatpush.msra.mxu0 0.0
  %974 = vmatpush.msra.mxu0 0.0
  %975 = vmatpush.msra.mxu0 0.0
  %976 = vmatpush.msra.mxu0 0.0
  %977 = vmatpush.msra.mxu0 0.0
  %978 = vmatpush.msra.mxu0 0.0
  %979 = vmatpush.msra.mxu0 0.0
  %980 = vmatpush.msra.mxu0 0.0
  %981 = vmatpush.msra.mxu0 0.0
  %982 = vmatpush.msra.mxu0 0.0
  %983 = vmatpush.msra.mxu0 0.0
  %984 = vmatpush.msra.mxu0 0.0
  %985 = vmatpush.msra.mxu0 0.0
  %986 = vmatpush.msra.mxu0 0.0
  %987 = vmatpush.msra.mxu0 %v964
  %988 = vmatpush.msra.mxu0 %v962
  %989 = vmatmul.f32.gmra.mxu0 %v968
  %v990 = vpop.f32.mrf.mxu0
  %v991 = vadd.f32 0.0, %v990
  %992 = vmatmul.f32.gmra.mxu0 %v971
  %v993 = vpop.f32.mrf.mxu0
  %v994 = vadd.f32 0.0, %v993
  %995 = vdwg.mxu0
  %996 = vrot.lane.b32.xlu0 %v256, 32
  %v997 = vpop.permute.xlu0 %996
  %998 = vrot.lane.b32.xlu0 %v259, 32
  %v999 = vpop.permute.xlu0 %998
  %v1003 = vsel %vm336, %v959, 0
  %v1006 = vsel %vm336, %v960, 0
  %1008 = vmatpush.msra.mxu0 0.0
  %1009 = vmatpush.msra.mxu0 0.0
  %1010 = vmatpush.msra.mxu0 0.0
  %1011 = vmatpush.msra.mxu0 0.0
  %1012 = vmatpush.msra.mxu0 0.0
  %1013 = vmatpush.msra.mxu0 0.0
  %1014 = vmatpush.msra.mxu0 0.0
  %1015 = vmatpush.msra.mxu0 0.0
  %1016 = vmatpush.msra.mxu0 0.0
  %1017 = vmatpush.msra.mxu0 0.0
  %1018 = vmatpush.msra.mxu0 0.0
  %1019 = vmatpush.msra.mxu0 0.0
  %1020 = vmatpush.msra.mxu0 0.0
  %1021 = vmatpush.msra.mxu0 0.0
  %1022 = vmatpush.msra.mxu0 %v999
  %1023 = vmatpush.msra.mxu0 %v997
  %1024 = vmatmul.f32.gmra.mxu0 %v1003
  %v1025 = vpop.f32.mrf.mxu0
  %v1026 = vadd.f32 0.0, %v1025
  %1027 = vmatmul.f32.gmra.mxu0 %v1006
  %v1028 = vpop.f32.mrf.mxu0
  %v1029 = vadd.f32 0.0, %v1028
  %1030 = vdwg.mxu0
  %1035 = vrot.lane.b32.xlu0 %v597, 32
  %v1036 = vpop.permute.xlu0 %1035
  %1037 = vrot.lane.b32.xlu0 %v600, 32
  %v1038 = vpop.permute.xlu0 %1037
  %1039 = vrot.lane.b32.xlu0 %v634, 32
  %v1040 = vpop.permute.xlu0 %1039
  %1041 = vrot.lane.b32.xlu0 %v637, 32
  %v1042 = vpop.permute.xlu0 %1041
  %1051 = vrot.lane.b32.xlu0 %v795, 64
  %v1052 = vpop.permute.xlu0 %1051
  %1053 = vrot.lane.b32.xlu0 %v798, 64
  %v1054 = vpop.permute.xlu0 %1053
  %1055 = vrot.lane.b32.xlu0 %v830, 64
  %v1056 = vpop.permute.xlu0 %1055
  %1057 = vrot.lane.b32.xlu0 %v833, 64
  %v1058 = vpop.permute.xlu0 %1057
  %1067 = vrot.lane.b32.xlu0 %v991, 96
  %v1068 = vpop.permute.xlu0 %1067
  %1069 = vrot.lane.b32.xlu0 %v994, 96
  %v1070 = vpop.permute.xlu0 %1069
  %1071 = vrot.lane.b32.xlu0 %v1026, 96
  %v1072 = vpop.permute.xlu0 %1071
  %1073 = vrot.lane.b32.xlu0 %v1029, 96
  %v1074 = vpop.permute.xlu0 %1073
  %v1079 = vsel %vm261, %v405, %v1036
  %v1080 = vsel %vm261, %v408, %v1038
  %v1081 = vsel %vm261, %v434, %v1040
  %v1082 = vsel %vm261, %v437, %v1042
  %vm1083 = vcmask 523264
  %v1084 = vsel %vm1083, %v1079, %v1052
  %v1085 = vsel %vm1083, %v1080, %v1054
  %v1086 = vsel %vm1083, %v1081, %v1056
  %v1087 = vsel %vm1083, %v1082, %v1058
  %v1088 = vsel %vm76, %v1084, %v1068
  %v1089 = vsel %vm76, %v1085, %v1070
  %v1090 = vsel %vm76, %v1086, %v1072
  %v1091 = vsel %vm76, %v1087, %v1074
  %v1092 = vld [vmem:[%s5] sm:$0xff]
  %v1093 = vld [vmem:[%s5 + $0x8] sm:$0xff]
  %v1094 = vld [vmem:[%s5 + $0x10] sm:$0xff]
  %v1095 = vld [vmem:[%s5 + $0x18] sm:$0xff]
  %v1096 = vld [vmem:[%s5 + $0x20] sm:$0xff]
  %v1097 = vld [vmem:[%s5 + $0x28] sm:$0xff]
  %v1098 = vld [vmem:[%s5 + $0x30] sm:$0xff]
  %v1099 = vld [vmem:[%s5 + $0x38] sm:$0xff]
  %v1100 = vld [vmem:[%s5 + $0x40] sm:$0xff]
  %v1101 = vld [vmem:[%s5 + $0x48] sm:$0xff]
  %v1102 = vld [vmem:[%s5 + $0x50] sm:$0xff]
  %v1103 = vld [vmem:[%s5 + $0x58] sm:$0xff]
  %v1104 = vld [vmem:[%s5 + $0x60] sm:$0xff]
  %v1105 = vld [vmem:[%s5 + $0x68] sm:$0xff]
  %v1106 = vld [vmem:[%s5 + $0x70] sm:$0xff]
  %v1107 = vld [vmem:[%s5 + $0x78] sm:$0xff]
  %v1108 = vld [vmem:[%s6] sm:$0x1]
  %v1110 = vperm.slane %v1108, 0
  %1112 = vmatpush.msra.mxu0 %v1107
  %1113 = vmatpush.msra.mxu0 %v1106
  %1114 = vmatpush.msra.mxu0 %v1105
  %1115 = vmatpush.msra.mxu0 %v1104
  %1116 = vmatpush.msra.mxu0 %v1103
  %1117 = vmatpush.msra.mxu0 %v1102
  %1118 = vmatpush.msra.mxu0 %v1101
  %1119 = vmatpush.msra.mxu0 %v1100
  %1120 = vmatpush.msra.mxu0 %v1099
  %1121 = vmatpush.msra.mxu0 %v1098
  %1122 = vmatpush.msra.mxu0 %v1097
  %1123 = vmatpush.msra.mxu0 %v1096
  %1124 = vmatpush.msra.mxu0 %v1095
  %1125 = vmatpush.msra.mxu0 %v1094
  %1126 = vmatpush.msra.mxu0 %v1093
  %1127 = vmatpush.msra.mxu0 %v1092
  %1128 = vmatmul.f32.gmra.mxu0 %v1088
  %v1129 = vpop.f32.mrf.mxu0
  %v1130 = vadd.f32 %v1110, %v1129
  %1131 = vmatmul.f32.gmra.mxu0 %v1089
  %v1132 = vpop.f32.mrf.mxu0
  %v1133 = vadd.f32 %v1110, %v1132
  %1134 = vmatmul.f32.gmra.mxu0 %v1090
  %v1135 = vpop.f32.mrf.mxu0
  %v1136 = vadd.f32 %v1110, %v1135
  %1137 = vmatmul.f32.gmra.mxu0 %v1091
  %v1138 = vpop.f32.mrf.mxu0
  %v1139 = vadd.f32 %v1110, %v1138
  %1140 = vdwg.mxu0
  %v1141 = vadd.f32 %v107, %v1130
  %v1142 = vadd.f32 %v110, %v1133
  %v1143 = vadd.f32 %v113, %v1136
  %v1144 = vadd.f32 %v116, %v1139
  %v1145 = vld [vmem:[%s7] sm:$0x1]
  %v1146 = vld [vmem:[%s8] sm:$0x1]
  %v1147 = vsel %vm76, %v1141, 0.0
  %1148 = vadd.xlane.f32.xlu0 %v1147
  %v1149 = vpop.xlane.xlu0 %1148
  %v1150 = vsel %vm76, %v1142, 0.0
  %1151 = vadd.xlane.f32.xlu0 %v1150
  %v1152 = vpop.xlane.xlu0 %1151
  %v1153 = vsel %vm76, %v1143, 0.0
  %1154 = vadd.xlane.f32.xlu0 %v1153
  %v1155 = vpop.xlane.xlu0 %1154
  %v1156 = vsel %vm76, %v1144, 0.0
  %1157 = vadd.xlane.f32.xlu0 %v1156
  %v1158 = vpop.xlane.xlu0 %1157
  %v1159 = vrcp.pop 96.0
  %v1160 = vmul.f32 96.0, %v1159
  %v1161 = vsub.f32 1.0, %v1160
  %v1162 = vmul.f32 %v1159, %v1161
  %v1163 = vadd.f32 %v1159, %v1162
  %vm1164 = vweird.f32 %v1159
  %v1165 = vsel %vm1164, %v1159, %v1163
  %v1166 = vmul.f32 %v1149, %v1165
  %v1167 = vmul.f32 %v1152, %v1165
  %v1168 = vmul.f32 %v1155, %v1165
  %v1169 = vmul.f32 %v1158, %v1165
  %v1170 = vsub.f32 %v1141, %v1166
  %v1171 = vsub.f32 %v1142, %v1167
  %v1172 = vsub.f32 %v1143, %v1168
  %v1173 = vsub.f32 %v1144, %v1169
  %v1174 = vmul.f32 %v1170, %v1170
  %v1175 = vmul.f32 %v1171, %v1171
  %v1176 = vmul.f32 %v1172, %v1172
  %v1177 = vmul.f32 %v1173, %v1173
  %v1178 = vsel %vm76, %v1174, 0.0
  %1179 = vadd.xlane.f32.xlu0 %v1178
  %v1180 = vpop.xlane.xlu0 %1179
  %v1181 = vsel %vm76, %v1175, 0.0
  %1182 = vadd.xlane.f32.xlu0 %v1181
  %v1183 = vpop.xlane.xlu0 %1182
  %v1184 = vsel %vm76, %v1176, 0.0
  %1185 = vadd.xlane.f32.xlu0 %v1184
  %v1186 = vpop.xlane.xlu0 %1185
  %v1187 = vsel %vm76, %v1177, 0.0
  %1188 = vadd.xlane.f32.xlu0 %v1187
  %v1189 = vpop.xlane.xlu0 %1188
  %v1190 = vmul.f32 %v1180, %v1165
  %v1191 = vmul.f32 %v1183, %v1165
  %v1192 = vmul.f32 %v1186, %v1165
  %v1193 = vmul.f32 %v1189, %v1165
  %v1194 = vadd.f32 %v1190, 1e-05
  %v1195 = vadd.f32 %v1191, 1e-05
  %v1196 = vadd.f32 %v1192, 1e-05
  %v1197 = vadd.f32 %v1193, 1e-05
  %v1198 = vrsqrt.pop %v1194
  %v1199 = vmul.f32 %v1198, %v1194
  %v1200 = vmul.f32 %v1199, %v1198
  %v1201 = vmul.f32 0.5, %v1200
  %v1202 = vsub.f32 1.5, %v1201
  %v1203 = vmul.f32 %v1198, %v1202
  %vm1204 = vweird.f32 %v1194
  %vm1205 = vweird.f32 %v1198
  %vm1206 = vmor %vm1204, %vm1205
  %v1207 = vsel %vm1206, %v1198, %v1203
  %v1208 = vrsqrt.pop %v1195
  %v1209 = vmul.f32 %v1208, %v1195
  %v1210 = vmul.f32 %v1209, %v1208
  %v1211 = vmul.f32 0.5, %v1210
  %v1212 = vsub.f32 1.5, %v1211
  %v1213 = vmul.f32 %v1208, %v1212
  %vm1214 = vweird.f32 %v1195
  %vm1215 = vweird.f32 %v1208
  %vm1216 = vmor %vm1214, %vm1215
  %v1217 = vsel %vm1216, %v1208, %v1213
  %v1218 = vrsqrt.pop %v1196
  %v1219 = vmul.f32 %v1218, %v1196
  %v1220 = vmul.f32 %v1219, %v1218
  %v1221 = vmul.f32 0.5, %v1220
  %v1222 = vsub.f32 1.5, %v1221
  %v1223 = vmul.f32 %v1218, %v1222
  %vm1224 = vweird.f32 %v1196
  %vm1225 = vweird.f32 %v1218
  %vm1226 = vmor %vm1224, %vm1225
  %v1227 = vsel %vm1226, %v1218, %v1223
  %v1228 = vrsqrt.pop %v1197
  %v1229 = vmul.f32 %v1228, %v1197
  %v1230 = vmul.f32 %v1229, %v1228
  %v1231 = vmul.f32 0.5, %v1230
  %v1232 = vsub.f32 1.5, %v1231
  %v1233 = vmul.f32 %v1228, %v1232
  %vm1234 = vweird.f32 %v1197
  %vm1235 = vweird.f32 %v1228
  %vm1236 = vmor %vm1234, %vm1235
  %v1237 = vsel %vm1236, %v1228, %v1233
  %v1238 = vmul.f32 %v1170, %v1207
  %v1239 = vmul.f32 %v1171, %v1217
  %v1240 = vmul.f32 %v1172, %v1227
  %v1241 = vmul.f32 %v1173, %v1237
  %v1243 = vperm.slane %v1145, 0
  %v1245 = vmul.f32 %v1238, %v1243
  %v1246 = vmul.f32 %v1239, %v1243
  %v1247 = vmul.f32 %v1240, %v1243
  %v1248 = vmul.f32 %v1241, %v1243
  %v1250 = vperm.slane %v1146, 0
  %v1252 = vadd.f32 %v1245, %v1250
  %v1253 = vadd.f32 %v1246, %v1250
  %v1254 = vadd.f32 %v1247, %v1250
  %v1255 = vadd.f32 %v1248, %v1250
  %v1256 = vld [vmem:[%s9] sm:$0xff]
  %v1257 = vld [vmem:[%s9 + $0x8] sm:$0xff]
  %v1258 = vld [vmem:[%s9 + $0x10] sm:$0xff]
  %v1259 = vld [vmem:[%s9 + $0x18] sm:$0xff]
  %v1260 = vld [vmem:[%s9 + $0x20] sm:$0xff]
  %v1261 = vld [vmem:[%s9 + $0x28] sm:$0xff]
  %v1262 = vld [vmem:[%s9 + $0x30] sm:$0xff]
  %v1263 = vld [vmem:[%s9 + $0x38] sm:$0xff]
  %v1264 = vld [vmem:[%s9 + $0x40] sm:$0xff]
  %v1265 = vld [vmem:[%s9 + $0x48] sm:$0xff]
  %v1266 = vld [vmem:[%s9 + $0x50] sm:$0xff]
  %v1267 = vld [vmem:[%s9 + $0x58] sm:$0xff]
  %v1268 = vld [vmem:[%s9 + $0x60] sm:$0xff]
  %v1269 = vld [vmem:[%s9 + $0x68] sm:$0xff]
  %v1270 = vld [vmem:[%s9 + $0x70] sm:$0xff]
  %v1271 = vld [vmem:[%s9 + $0x78] sm:$0xff]
  %v1272 = vld [vmem:[%s9 + $0x80] sm:$0xff]
  %v1273 = vld [vmem:[%s9 + $0x88] sm:$0xff]
  %v1274 = vld [vmem:[%s9 + $0x90] sm:$0xff]
  %v1275 = vld [vmem:[%s9 + $0x98] sm:$0xff]
  %v1276 = vld [vmem:[%s9 + $0xa0] sm:$0xff]
  %v1277 = vld [vmem:[%s9 + $0xa8] sm:$0xff]
  %v1278 = vld [vmem:[%s9 + $0xb0] sm:$0xff]
  %v1279 = vld [vmem:[%s9 + $0xb8] sm:$0xff]
  %v1280 = vld [vmem:[%s9 + $0xc0] sm:$0xff]
  %v1281 = vld [vmem:[%s9 + $0xc8] sm:$0xff]
  %v1282 = vld [vmem:[%s9 + $0xd0] sm:$0xff]
  %v1283 = vld [vmem:[%s9 + $0xd8] sm:$0xff]
  %v1284 = vld [vmem:[%s9 + $0xe0] sm:$0xff]
  %v1285 = vld [vmem:[%s9 + $0xe8] sm:$0xff]
  %v1286 = vld [vmem:[%s9 + $0xf0] sm:$0xff]
  %v1287 = vld [vmem:[%s9 + $0xf8] sm:$0xff]
  %v1288 = vld [vmem:[%s9 + $0x100] sm:$0xff]
  %v1289 = vld [vmem:[%s9 + $0x108] sm:$0xff]
  %v1290 = vld [vmem:[%s9 + $0x110] sm:$0xff]
  %v1291 = vld [vmem:[%s9 + $0x118] sm:$0xff]
  %v1292 = vld [vmem:[%s9 + $0x120] sm:$0xff]
  %v1293 = vld [vmem:[%s9 + $0x128] sm:$0xff]
  %v1294 = vld [vmem:[%s9 + $0x130] sm:$0xff]
  %v1295 = vld [vmem:[%s9 + $0x138] sm:$0xff]
  %v1296 = vld [vmem:[%s9 + $0x140] sm:$0xff]
  %v1297 = vld [vmem:[%s9 + $0x148] sm:$0xff]
  %v1298 = vld [vmem:[%s9 + $0x150] sm:$0xff]
  %v1299 = vld [vmem:[%s9 + $0x158] sm:$0xff]
  %v1300 = vld [vmem:[%s9 + $0x160] sm:$0xff]
  %v1301 = vld [vmem:[%s9 + $0x168] sm:$0xff]
  %v1302 = vld [vmem:[%s9 + $0x170] sm:$0xff]
  %v1303 = vld [vmem:[%s9 + $0x178] sm:$0xff]
  %v1304 = vld [vmem:[%s10] sm:$0xf]
  %v1306 = vperm.slane %v1304, 0
  %v1307 = vperm.slane %v1304, 1
  %v1308 = vperm.slane %v1304, 2
  %v1309 = vperm.slane %v1304, 3
  %v1315 = vsel %vm76, %v1252, 0
  %v1318 = vsel %vm76, %v1253, 0
  %v1321 = vsel %vm76, %v1254, 0
  %v1324 = vsel %vm76, %v1255, 0
  %1326 = vmatpush.msra.mxu0 0.0
  %1327 = vmatpush.msra.mxu0 0.0
  %1328 = vmatpush.msra.mxu0 0.0
  %1329 = vmatpush.msra.mxu0 0.0
  %1330 = vmatpush.msra.mxu0 %v1300
  %1331 = vmatpush.msra.mxu0 %v1296
  %1332 = vmatpush.msra.mxu0 %v1292
  %1333 = vmatpush.msra.mxu0 %v1288
  %1334 = vmatpush.msra.mxu0 %v1284
  %1335 = vmatpush.msra.mxu0 %v1280
  %1336 = vmatpush.msra.mxu0 %v1276
  %1337 = vmatpush.msra.mxu0 %v1272
  %1338 = vmatpush.msra.mxu0 %v1268
  %1339 = vmatpush.msra.mxu0 %v1264
  %1340 = vmatpush.msra.mxu0 %v1260
  %1341 = vmatpush.msra.mxu0 %v1256
  %1342 = vmatmul.f32.gmra.mxu0 %v1315
  %v1343 = vpop.f32.mrf.mxu0
  %v1344 = vadd.f32 %v1306, %v1343
  %1345 = vmatmul.f32.gmra.mxu0 %v1318
  %v1346 = vpop.f32.mrf.mxu0
  %v1347 = vadd.f32 %v1306, %v1346
  %1348 = vmatmul.f32.gmra.mxu0 %v1321
  %v1349 = vpop.f32.mrf.mxu0
  %v1350 = vadd.f32 %v1306, %v1349
  %1351 = vmatmul.f32.gmra.mxu0 %v1324
  %v1352 = vpop.f32.mrf.mxu0
  %v1353 = vadd.f32 %v1306, %v1352
  %1354 = vdwg.mxu0
  %1355 = vmatpush.msra.mxu0 0.0
  %1356 = vmatpush.msra.mxu0 0.0
  %1357 = vmatpush.msra.mxu0 0.0
  %1358 = vmatpush.msra.mxu0 0.0
  %1359 = vmatpush.msra.mxu0 %v1301
  %1360 = vmatpush.msra.mxu0 %v1297
  %1361 = vmatpush.msra.mxu0 %v1293
  %1362 = vmatpush.msra.mxu0 %v1289
  %1363 = vmatpush.msra.mxu0 %v1285
  %1364 = vmatpush.msra.mxu0 %v1281
  %1365 = vmatpush.msra.mxu0 %v1277
  %1366 = vmatpush.msra.mxu0 %v1273
  %1367 = vmatpush.msra.mxu0 %v1269
  %1368 = vmatpush.msra.mxu0 %v1265
  %1369 = vmatpush.msra.mxu0 %v1261
  %1370 = vmatpush.msra.mxu0 %v1257
  %1371 = vmatmul.f32.gmra.mxu0 %v1315
  %v1372 = vpop.f32.mrf.mxu0
  %v1373 = vadd.f32 %v1307, %v1372
  %1374 = vmatmul.f32.gmra.mxu0 %v1318
  %v1375 = vpop.f32.mrf.mxu0
  %v1376 = vadd.f32 %v1307, %v1375
  %1377 = vmatmul.f32.gmra.mxu0 %v1321
  %v1378 = vpop.f32.mrf.mxu0
  %v1379 = vadd.f32 %v1307, %v1378
  %1380 = vmatmul.f32.gmra.mxu0 %v1324
  %v1381 = vpop.f32.mrf.mxu0
  %v1382 = vadd.f32 %v1307, %v1381
  %1383 = vdwg.mxu0
  %1384 = vmatpush.msra.mxu0 0.0
  %1385 = vmatpush.msra.mxu0 0.0
  %1386 = vmatpush.msra.mxu0 0.0
  %1387 = vmatpush.msra.mxu0 0.0
  %1388 = vmatpush.msra.mxu0 %v1302
  %1389 = vmatpush.msra.mxu0 %v1298
  %1390 = vmatpush.msra.mxu0 %v1294
  %1391 = vmatpush.msra.mxu0 %v1290
  %1392 = vmatpush.msra.mxu0 %v1286
  %1393 = vmatpush.msra.mxu0 %v1282
  %1394 = vmatpush.msra.mxu0 %v1278
  %1395 = vmatpush.msra.mxu0 %v1274
  %1396 = vmatpush.msra.mxu0 %v1270
  %1397 = vmatpush.msra.mxu0 %v1266
  %1398 = vmatpush.msra.mxu0 %v1262
  %1399 = vmatpush.msra.mxu0 %v1258
  %1400 = vmatmul.f32.gmra.mxu0 %v1315
  %v1401 = vpop.f32.mrf.mxu0
  %v1402 = vadd.f32 %v1308, %v1401
  %1403 = vmatmul.f32.gmra.mxu0 %v1318
  %v1404 = vpop.f32.mrf.mxu0
  %v1405 = vadd.f32 %v1308, %v1404
  %1406 = vmatmul.f32.gmra.mxu0 %v1321
  %v1407 = vpop.f32.mrf.mxu0
  %v1408 = vadd.f32 %v1308, %v1407
  %1409 = vmatmul.f32.gmra.mxu0 %v1324
  %v1410 = vpop.f32.mrf.mxu0
  %v1411 = vadd.f32 %v1308, %v1410
  %1412 = vdwg.mxu0
  %1413 = vmatpush.msra.mxu0 0.0
  %1414 = vmatpush.msra.mxu0 0.0
  %1415 = vmatpush.msra.mxu0 0.0
  %1416 = vmatpush.msra.mxu0 0.0
  %1417 = vmatpush.msra.mxu0 %v1303
  %1418 = vmatpush.msra.mxu0 %v1299
  %1419 = vmatpush.msra.mxu0 %v1295
  %1420 = vmatpush.msra.mxu0 %v1291
  %1421 = vmatpush.msra.mxu0 %v1287
  %1422 = vmatpush.msra.mxu0 %v1283
  %1423 = vmatpush.msra.mxu0 %v1279
  %1424 = vmatpush.msra.mxu0 %v1275
  %1425 = vmatpush.msra.mxu0 %v1271
  %1426 = vmatpush.msra.mxu0 %v1267
  %1427 = vmatpush.msra.mxu0 %v1263
  %1428 = vmatpush.msra.mxu0 %v1259
  %1429 = vmatmul.f32.gmra.mxu0 %v1315
  %v1430 = vpop.f32.mrf.mxu0
  %v1431 = vadd.f32 %v1309, %v1430
  %1432 = vmatmul.f32.gmra.mxu0 %v1318
  %v1433 = vpop.f32.mrf.mxu0
  %v1434 = vadd.f32 %v1309, %v1433
  %1435 = vmatmul.f32.gmra.mxu0 %v1321
  %v1436 = vpop.f32.mrf.mxu0
  %v1437 = vadd.f32 %v1309, %v1436
  %1438 = vmatmul.f32.gmra.mxu0 %v1324
  %v1439 = vpop.f32.mrf.mxu0
  %v1440 = vadd.f32 %v1309, %v1439
  %1441 = vdwg.mxu0
  %v1442 = vmax.f32 %v1344, 0.0
  %v1443 = vmax.f32 %v1373, 0.0
  %v1444 = vmax.f32 %v1402, 0.0
  %v1445 = vmax.f32 %v1431, 0.0
  %v1446 = vmax.f32 %v1347, 0.0
  %v1447 = vmax.f32 %v1376, 0.0
  %v1448 = vmax.f32 %v1405, 0.0
  %v1449 = vmax.f32 %v1434, 0.0
  %v1450 = vmax.f32 %v1350, 0.0
  %v1451 = vmax.f32 %v1379, 0.0
  %v1452 = vmax.f32 %v1408, 0.0
  %v1453 = vmax.f32 %v1437, 0.0
  %v1454 = vmax.f32 %v1353, 0.0
  %v1455 = vmax.f32 %v1382, 0.0
  %v1456 = vmax.f32 %v1411, 0.0
  %v1457 = vmax.f32 %v1440, 0.0
  %v1458 = vld [vmem:[%s11] sm:$0xff]
  %v1459 = vld [vmem:[%s11 + $0x8] sm:$0xff]
  %v1460 = vld [vmem:[%s11 + $0x10] sm:$0xff]
  %v1461 = vld [vmem:[%s11 + $0x18] sm:$0xff]
  %v1462 = vld [vmem:[%s11 + $0x20] sm:$0xff]
  %v1463 = vld [vmem:[%s11 + $0x28] sm:$0xff]
  %v1464 = vld [vmem:[%s11 + $0x30] sm:$0xff]
  %v1465 = vld [vmem:[%s11 + $0x38] sm:$0xff]
  %v1466 = vld [vmem:[%s11 + $0x40] sm:$0xff]
  %v1467 = vld [vmem:[%s11 + $0x48] sm:$0xff]
  %v1468 = vld [vmem:[%s11 + $0x50] sm:$0xff]
  %v1469 = vld [vmem:[%s11 + $0x58] sm:$0xff]
  %v1470 = vld [vmem:[%s11 + $0x60] sm:$0xff]
  %v1471 = vld [vmem:[%s11 + $0x68] sm:$0xff]
  %v1472 = vld [vmem:[%s11 + $0x70] sm:$0xff]
  %v1473 = vld [vmem:[%s11 + $0x78] sm:$0xff]
  %v1474 = vld [vmem:[%s11 + $0x80] sm:$0xff]
  %v1475 = vld [vmem:[%s11 + $0x88] sm:$0xff]
  %v1476 = vld [vmem:[%s11 + $0x90] sm:$0xff]
  %v1477 = vld [vmem:[%s11 + $0x98] sm:$0xff]
  %v1478 = vld [vmem:[%s11 + $0xa0] sm:$0xff]
  %v1479 = vld [vmem:[%s11 + $0xa8] sm:$0xff]
  %v1480 = vld [vmem:[%s11 + $0xb0] sm:$0xff]
  %v1481 = vld [vmem:[%s11 + $0xb8] sm:$0xff]
  %v1482 = vld [vmem:[%s11 + $0xc0] sm:$0xff]
  %v1483 = vld [vmem:[%s11 + $0xc8] sm:$0xff]
  %v1484 = vld [vmem:[%s11 + $0xd0] sm:$0xff]
  %v1485 = vld [vmem:[%s11 + $0xd8] sm:$0xff]
  %v1486 = vld [vmem:[%s11 + $0xe0] sm:$0xff]
  %v1487 = vld [vmem:[%s11 + $0xe8] sm:$0xff]
  %v1488 = vld [vmem:[%s11 + $0xf0] sm:$0xff]
  %v1489 = vld [vmem:[%s11 + $0xf8] sm:$0xff]
  %v1490 = vld [vmem:[%s11 + $0x100] sm:$0xff]
  %v1491 = vld [vmem:[%s11 + $0x108] sm:$0xff]
  %v1492 = vld [vmem:[%s11 + $0x110] sm:$0xff]
  %v1493 = vld [vmem:[%s11 + $0x118] sm:$0xff]
  %v1494 = vld [vmem:[%s11 + $0x120] sm:$0xff]
  %v1495 = vld [vmem:[%s11 + $0x128] sm:$0xff]
  %v1496 = vld [vmem:[%s11 + $0x130] sm:$0xff]
  %v1497 = vld [vmem:[%s11 + $0x138] sm:$0xff]
  %v1498 = vld [vmem:[%s11 + $0x140] sm:$0xff]
  %v1499 = vld [vmem:[%s11 + $0x148] sm:$0xff]
  %v1500 = vld [vmem:[%s11 + $0x150] sm:$0xff]
  %v1501 = vld [vmem:[%s11 + $0x158] sm:$0xff]
  %v1502 = vld [vmem:[%s11 + $0x160] sm:$0xff]
  %v1503 = vld [vmem:[%s11 + $0x168] sm:$0xff]
  %v1504 = vld [vmem:[%s11 + $0x170] sm:$0xff]
  %v1505 = vld [vmem:[%s11 + $0x178] sm:$0xff]
  %v1506 = vld [vmem:[%s11 + $0x180] sm:$0xff]
  %v1507 = vld [vmem:[%s11 + $0x188] sm:$0xff]
  %v1508 = vld [vmem:[%s11 + $0x190] sm:$0xff]
  %v1509 = vld [vmem:[%s11 + $0x198] sm:$0xff]
  %v1510 = vld [vmem:[%s11 + $0x1a0] sm:$0xff]
  %v1511 = vld [vmem:[%s11 + $0x1a8] sm:$0xff]
  %v1512 = vld [vmem:[%s11 + $0x1b0] sm:$0xff]
  %v1513 = vld [vmem:[%s11 + $0x1b8] sm:$0xff]
  %v1514 = vld [vmem:[%s11 + $0x1c0] sm:$0xff]
  %v1515 = vld [vmem:[%s11 + $0x1c8] sm:$0xff]
  %v1516 = vld [vmem:[%s11 + $0x1d0] sm:$0xff]
  %v1517 = vld [vmem:[%s11 + $0x1d8] sm:$0xff]
  %v1518 = vld [vmem:[%s11 + $0x1e0] sm:$0xff]
  %v1519 = vld [vmem:[%s11 + $0x1e8] sm:$0xff]
  %v1520 = vld [vmem:[%s11 + $0x1f0] sm:$0xff]
  %v1521 = vld [vmem:[%s11 + $0x1f8] sm:$0xff]
  %v1522 = vld [vmem:[%s12] sm:$0x1]
  %v1524 = vperm.slane %v1522, 0
  %1526 = vmatpush.msra.mxu0 %v1473
  %1527 = vmatpush.msra.mxu0 %v1472
  %1528 = vmatpush.msra.mxu0 %v1471
  %1529 = vmatpush.msra.mxu0 %v1470
  %1530 = vmatpush.msra.mxu0 %v1469
  %1531 = vmatpush.msra.mxu0 %v1468
  %1532 = vmatpush.msra.mxu0 %v1467
  %1533 = vmatpush.msra.mxu0 %v1466
  %1534 = vmatpush.msra.mxu0 %v1465
  %1535 = vmatpush.msra.mxu0 %v1464
  %1536 = vmatpush.msra.mxu0 %v1463
  %1537 = vmatpush.msra.mxu0 %v1462
  %1538 = vmatpush.msra.mxu0 %v1461
  %1539 = vmatpush.msra.mxu0 %v1460
  %1540 = vmatpush.msra.mxu0 %v1459
  %1541 = vmatpush.msra.mxu0 %v1458
  %1542 = vmatmul.f32.gmra.mxu0 %v1442
  %v1543 = vpop.f32.mrf.mxu0
  %v1544 = vadd.f32 %v1524, %v1543
  %1545 = vmatmul.f32.gmra.mxu0 %v1446
  %v1546 = vpop.f32.mrf.mxu0
  %v1547 = vadd.f32 %v1524, %v1546
  %1548 = vmatmul.f32.gmra.mxu0 %v1450
  %v1549 = vpop.f32.mrf.mxu0
  %v1550 = vadd.f32 %v1524, %v1549
  %1551 = vmatmul.f32.gmra.mxu0 %v1454
  %v1552 = vpop.f32.mrf.mxu0
  %v1553 = vadd.f32 %v1524, %v1552
  %1554 = vdwg.mxu0
  %1555 = vmatpush.msra.mxu0 %v1489
  %1556 = vmatpush.msra.mxu0 %v1488
  %1557 = vmatpush.msra.mxu0 %v1487
  %1558 = vmatpush.msra.mxu0 %v1486
  %1559 = vmatpush.msra.mxu0 %v1485
  %1560 = vmatpush.msra.mxu0 %v1484
  %1561 = vmatpush.msra.mxu0 %v1483
  %1562 = vmatpush.msra.mxu0 %v1482
  %1563 = vmatpush.msra.mxu0 %v1481
  %1564 = vmatpush.msra.mxu0 %v1480
  %1565 = vmatpush.msra.mxu0 %v1479
  %1566 = vmatpush.msra.mxu0 %v1478
  %1567 = vmatpush.msra.mxu0 %v1477
  %1568 = vmatpush.msra.mxu0 %v1476
  %1569 = vmatpush.msra.mxu0 %v1475
  %1570 = vmatpush.msra.mxu0 %v1474
  %1571 = vmatmul.f32.gmra.mxu0 %v1443
  %v1572 = vpop.f32.mrf.mxu0
  %v1573 = vadd.f32 %v1544, %v1572
  %1574 = vmatmul.f32.gmra.mxu0 %v1447
  %v1575 = vpop.f32.mrf.mxu0
  %v1576 = vadd.f32 %v1547, %v1575
  %1577 = vmatmul.f32.gmra.mxu0 %v1451
  %v1578 = vpop.f32.mrf.mxu0
  %v1579 = vadd.f32 %v1550, %v1578
  %1580 = vmatmul.f32.gmra.mxu0 %v1455
  %v1581 = vpop.f32.mrf.mxu0
  %v1582 = vadd.f32 %v1553, %v1581
  %1583 = vdwg.mxu0
  %1584 = vmatpush.msra.mxu0 %v1505
  %1585 = vmatpush.msra.mxu0 %v1504
  %1586 = vmatpush.msra.mxu0 %v1503
  %1587 = vmatpush.msra.mxu0 %v1502
  %1588 = vmatpush.msra.mxu0 %v1501
  %1589 = vmatpush.msra.mxu0 %v1500
  %1590 = vmatpush.msra.mxu0 %v1499
  %1591 = vmatpush.msra.mxu0 %v1498
  %1592 = vmatpush.msra.mxu0 %v1497
  %1593 = vmatpush.msra.mxu0 %v1496
  %1594 = vmatpush.msra.mxu0 %v1495
  %1595 = vmatpush.msra.mxu0 %v1494
  %1596 = vmatpush.msra.mxu0 %v1493
  %1597 = vmatpush.msra.mxu0 %v1492
  %1598 = vmatpush.msra.mxu0 %v1491
  %1599 = vmatpush.msra.mxu0 %v1490
  %1600 = vmatmul.f32.gmra.mxu0 %v1444
  %v1601 = vpop.f32.mrf.mxu0
  %v1602 = vadd.f32 %v1573, %v1601
  %1603 = vmatmul.f32.gmra.mxu0 %v1448
  %v1604 = vpop.f32.mrf.mxu0
  %v1605 = vadd.f32 %v1576, %v1604
  %1606 = vmatmul.f32.gmra.mxu0 %v1452
  %v1607 = vpop.f32.mrf.mxu0
  %v1608 = vadd.f32 %v1579, %v1607
  %1609 = vmatmul.f32.gmra.mxu0 %v1456
  %v1610 = vpop.f32.mrf.mxu0
  %v1611 = vadd.f32 %v1582, %v1610
  %1612 = vdwg.mxu0
  %1613 = vmatpush.msra.mxu0 %v1521
  %1614 = vmatpush.msra.mxu0 %v1520
  %1615 = vmatpush.msra.mxu0 %v1519
  %1616 = vmatpush.msra.mxu0 %v1518
  %1617 = vmatpush.msra.mxu0 %v1517
  %1618 = vmatpush.msra.mxu0 %v1516
  %1619 = vmatpush.msra.mxu0 %v1515
  %1620 = vmatpush.msra.mxu0 %v1514
  %1621 = vmatpush.msra.mxu0 %v1513
  %1622 = vmatpush.msra.mxu0 %v1512
  %1623 = vmatpush.msra.mxu0 %v1511
  %1624 = vmatpush.msra.mxu0 %v1510
  %1625 = vmatpush.msra.mxu0 %v1509
  %1626 = vmatpush.msra.mxu0 %v1508
  %1627 = vmatpush.msra.mxu0 %v1507
  %1628 = vmatpush.msra.mxu0 %v1506
  %1629 = vmatmul.f32.gmra.mxu0 %v1445
  %v1630 = vpop.f32.mrf.mxu0
  %v1631 = vadd.f32 %v1602, %v1630
  %1632 = vmatmul.f32.gmra.mxu0 %v1449
  %v1633 = vpop.f32.mrf.mxu0
  %v1634 = vadd.f32 %v1605, %v1633
  %1635 = vmatmul.f32.gmra.mxu0 %v1453
  %v1636 = vpop.f32.mrf.mxu0
  %v1637 = vadd.f32 %v1608, %v1636
  %1638 = vmatmul.f32.gmra.mxu0 %v1457
  %v1639 = vpop.f32.mrf.mxu0
  %v1640 = vadd.f32 %v1611, %v1639
  %1641 = vdwg.mxu0
  %v1642 = vadd.f32 %v1252, %v1631
  %v1643 = vadd.f32 %v1253, %v1634
  %v1644 = vadd.f32 %v1254, %v1637
  %v1645 = vadd.f32 %v1255, %v1640
  %v1646 = vld [vmem:[%s13] sm:$0x1]
  %v1647 = vld [vmem:[%s14] sm:$0x1]
  %v1648 = vsel %vm76, %v1642, 0.0
  %1649 = vadd.xlane.f32.xlu0 %v1648
  %v1650 = vpop.xlane.xlu0 %1649
  %v1651 = vsel %vm76, %v1643, 0.0
  %1652 = vadd.xlane.f32.xlu0 %v1651
  %v1653 = vpop.xlane.xlu0 %1652
  %v1654 = vsel %vm76, %v1644, 0.0
  %1655 = vadd.xlane.f32.xlu0 %v1654
  %v1656 = vpop.xlane.xlu0 %1655
  %v1657 = vsel %vm76, %v1645, 0.0
  %1658 = vadd.xlane.f32.xlu0 %v1657
  %v1659 = vpop.xlane.xlu0 %1658
  %v1660 = vmul.f32 %v1650, %v1165
  %v1661 = vmul.f32 %v1653, %v1165
  %v1662 = vmul.f32 %v1656, %v1165
  %v1663 = vmul.f32 %v1659, %v1165
  %v1664 = vsub.f32 %v1642, %v1660
  %v1665 = vsub.f32 %v1643, %v1661
  %v1666 = vsub.f32 %v1644, %v1662
  %v1667 = vsub.f32 %v1645, %v1663
  %v1668 = vmul.f32 %v1664, %v1664
  %v1669 = vmul.f32 %v1665, %v1665
  %v1670 = vmul.f32 %v1666, %v1666
  %v1671 = vmul.f32 %v1667, %v1667
  %v1672 = vsel %vm76, %v1668, 0.0
  %1673 = vadd.xlane.f32.xlu0 %v1672
  %v1674 = vpop.xlane.xlu0 %1673
  %v1675 = vsel %vm76, %v1669, 0.0
  %1676 = vadd.xlane.f32.xlu0 %v1675
  %v1677 = vpop.xlane.xlu0 %1676
  %v1678 = vsel %vm76, %v1670, 0.0
  %1679 = vadd.xlane.f32.xlu0 %v1678
  %v1680 = vpop.xlane.xlu0 %1679
  %v1681 = vsel %vm76, %v1671, 0.0
  %1682 = vadd.xlane.f32.xlu0 %v1681
  %v1683 = vpop.xlane.xlu0 %1682
  %v1684 = vmul.f32 %v1674, %v1165
  %v1685 = vmul.f32 %v1677, %v1165
  %v1686 = vmul.f32 %v1680, %v1165
  %v1687 = vmul.f32 %v1683, %v1165
  %v1688 = vadd.f32 %v1684, 1e-05
  %v1689 = vadd.f32 %v1685, 1e-05
  %v1690 = vadd.f32 %v1686, 1e-05
  %v1691 = vadd.f32 %v1687, 1e-05
  %v1692 = vrsqrt.pop %v1688
  %v1693 = vmul.f32 %v1692, %v1688
  %v1694 = vmul.f32 %v1693, %v1692
  %v1695 = vmul.f32 0.5, %v1694
  %v1696 = vsub.f32 1.5, %v1695
  %v1697 = vmul.f32 %v1692, %v1696
  %vm1698 = vweird.f32 %v1688
  %vm1699 = vweird.f32 %v1692
  %vm1700 = vmor %vm1698, %vm1699
  %v1701 = vsel %vm1700, %v1692, %v1697
  %v1702 = vrsqrt.pop %v1689
  %v1703 = vmul.f32 %v1702, %v1689
  %v1704 = vmul.f32 %v1703, %v1702
  %v1705 = vmul.f32 0.5, %v1704
  %v1706 = vsub.f32 1.5, %v1705
  %v1707 = vmul.f32 %v1702, %v1706
  %vm1708 = vweird.f32 %v1689
  %vm1709 = vweird.f32 %v1702
  %vm1710 = vmor %vm1708, %vm1709
  %v1711 = vsel %vm1710, %v1702, %v1707
  %v1712 = vrsqrt.pop %v1690
  %v1713 = vmul.f32 %v1712, %v1690
  %v1714 = vmul.f32 %v1713, %v1712
  %v1715 = vmul.f32 0.5, %v1714
  %v1716 = vsub.f32 1.5, %v1715
  %v1717 = vmul.f32 %v1712, %v1716
  %vm1718 = vweird.f32 %v1690
  %vm1719 = vweird.f32 %v1712
  %vm1720 = vmor %vm1718, %vm1719
  %v1721 = vsel %vm1720, %v1712, %v1717
  %v1722 = vrsqrt.pop %v1691
  %v1723 = vmul.f32 %v1722, %v1691
  %v1724 = vmul.f32 %v1723, %v1722
  %v1725 = vmul.f32 0.5, %v1724
  %v1726 = vsub.f32 1.5, %v1725
  %v1727 = vmul.f32 %v1722, %v1726
  %vm1728 = vweird.f32 %v1691
  %vm1729 = vweird.f32 %v1722
  %vm1730 = vmor %vm1728, %vm1729
  %v1731 = vsel %vm1730, %v1722, %v1727
  %v1732 = vmul.f32 %v1664, %v1701
  %v1733 = vmul.f32 %v1665, %v1711
  %v1734 = vmul.f32 %v1666, %v1721
  %v1735 = vmul.f32 %v1667, %v1731
  %v1737 = vperm.slane %v1646, 0
  %v1739 = vmul.f32 %v1732, %v1737
  %v1740 = vmul.f32 %v1733, %v1737
  %v1741 = vmul.f32 %v1734, %v1737
  %v1742 = vmul.f32 %v1735, %v1737
  %v1744 = vperm.slane %v1647, 0
  %v1746 = vadd.f32 %v1739, %v1744
  %v1747 = vadd.f32 %v1740, %v1744
  %v1748 = vadd.f32 %v1741, %v1744
  %v1749 = vadd.f32 %v1742, %v1744
  %v1750 = vld [vmem:[%s15] sm:$0x1f]
  %v1751 = vld [vmem:[%s16] sm:$0x1f]
  %1753 = vset.pattern.permute.xlu0 0
  %1754 = vperm.xlu0 %1753, %v1751
  %v1755 = vpop.permute.xlu0 %1754
  %v1758 = vsel %vm76, %v1750, 0
  %v1761 = vsel %vm76, %v1746, 0
  %v1764 = vsel %vm76, %v1747, 0
  %v1767 = vsel %vm76, %v1748, 0
  %v1770 = vsel %vm76, %v1749, 0
  %1772 = vmatpush.xpose.msra.mxu0 0.0
  %1773 = vmatpush.xpose.msra.mxu0 0.0
  %1774 = vmatpush.xpose.msra.mxu0 0.0
  %1775 = vmatpush.xpose.msra.mxu0 0.0
  %1776 = vmatpush.xpose.msra.mxu0 0.0
  %1777 = vmatpush.xpose.msra.mxu0 0.0
  %1778 = vmatpush.xpose.msra.mxu0 0.0
  %1779 = vmatpush.xpose.msra.mxu0 0.0
  %1780 = vmatpush.xpose.msra.mxu0 0.0
  %1781 = vmatpush.xpose.msra.mxu0 0.0
  %1782 = vmatpush.xpose.msra.mxu0 0.0
  %1783 = vmatpush.xpose.msra.mxu0 0.0
  %1784 = vmatpush.xpose.msra.mxu0 %v1770
  %1785 = vmatpush.xpose.msra.mxu0 %v1767
  %1786 = vmatpush.xpose.msra.mxu0 %v1764
  %1787 = vmatpush.xpose.msra.mxu0 %v1761
  %1788 = vmatmul.f32.gmra.mxu0 %v1758
  %v1789 = vpop.f32.mrf.mxu0
  %v1790 = vadd.f32 %v1755, %v1789
  %1791 = vdwg.mxu0
  %vm1792 = vcmask 258048
  %1793 = vst.msk [vmem:[%s17] sm:$0x1f] %vm1792, %v1790
  // Predicated region
  $region70: #{postprocess_net_simple.1} parent=0 // pred_check
    _
  $region71: #{postprocess_net_simple.1} parent=0 // pred_check_branch
    %1795 = sbr.rel (0) target = $region73
  $region72: #{postprocess_net_simple.1} parent=0 // pred_region
    _
  $region73: #{postprocess_net_simple.1} parent=0 // pred_fallthru
    _
  // Predicated region
  $region74: #{postprocess_net_simple.1} parent=0 // pred_check
    _
  $region75: #{postprocess_net_simple.1} parent=0 // pred_check_branch
    %1797 = sbr.rel (0) target = $region77
  $region76: #{postprocess_net_simple.1} parent=0 // pred_region
    _
  $region77: #{postprocess_net_simple.1} parent=0 // pred_fallthru
    _

</llo_original>
